<compile_context>
chip_gen: v7x
topology: tpu7x:2x2x1
jax: 0.10.0
libtpu: 0.0.40
codegen_flags: <defaults>
</compile_context>

<pallas_src>
import functools

import jax
import jax.numpy as jnp
import numpy as np
from jax.experimental import pallas as pl
from jax.experimental.pallas import tpu as pltpu


def _silu(v):
    return v * jax.nn.sigmoid(v)


def mbconv_kernel(x_ref, w1t_ref, b1_ref, dwt_ref, mask_ref, b2_ref,
                  sew1t_ref, seb1_ref, sew2t_ref, seb2_ref,
                  w3t_ref, b3_ref, out_ref, *, H, W, residual):
    HW = H * W

    x = x_ref[0]                                        # (Cin, H*W), f32

    # ---- 1) pointwise expand (BN scale folded into w1t) + SiLU ------------
    h1 = jnp.dot(w1t_ref[...], x.astype(jnp.bfloat16),
                 preferred_element_type=jnp.float32)    # (Chid, H*W)
    h1 = _silu(h1 + b1_ref[...])

    # ---- 2) depthwise 3x3, stride 1, pad 1 (BN scale folded into taps) ----
    # Tap (oy, ox) is a shift of oy*W + ox along the flat H*W (lane) axis:
    # a pltpu.roll (XLU) plus a precomputed {0,1} halo mask (VPU multiply).
    dwt = dwt_ref[...]                                  # (Chid, 9), f32
    masks = mask_ref[...]                               # (9, H*W), f32
    acc = None
    for oy in (-1, 0, 1):
        for ox in (-1, 0, 1):
            k = (oy + 1) * 3 + (ox + 1)
            shift = oy * W + ox
            # rolled[:, r] == h1[:, (r + shift) mod HW]; mask kills wrap rows.
            v = h1 if shift == 0 else pltpu.roll(h1, (-shift) % HW, 1)
            v = v * dwt[:, k:k + 1]
            if shift != 0:
                v = v * masks[k:k + 1, :]
            acc = v if acc is None else acc + v
    h2 = _silu(acc + b2_ref[...])                       # (Chid, H*W)

    # ---- 3) squeeze-and-excitation (global pool over this image) ----------
    pooled = jnp.mean(h2, axis=1, keepdims=True)        # (Chid, 1)
    se = jnp.dot(sew1t_ref[...], pooled,
                 preferred_element_type=jnp.float32) + seb1_ref[...]
    se = jnp.maximum(se, 0.0)                           # ReLU
    se = jnp.dot(sew2t_ref[...], se,
                 preferred_element_type=jnp.float32) + seb2_ref[...]
    h3 = h2 * jax.nn.sigmoid(se)                        # per-channel gate

    # ---- 4) pointwise project (BN scale folded into w3t) + SiLU -----------
    h4 = jnp.dot(w3t_ref[...], h3.astype(jnp.bfloat16),
                 preferred_element_type=jnp.float32)    # (Cout, H*W)
    h4 = _silu(h4 + b3_ref[...])
    if residual:
        h4 = h4 + x                                     # exact f32 residual
    out_ref[0] = h4.astype(out_ref.dtype)


def _halo_masks(H, W):
    """(9, H*W) {0,1} validity mask per 3x3 tap (stride 1, pad 1)."""
    yy, xx = np.meshgrid(np.arange(H), np.arange(W), indexing="ij")
    m = np.zeros((9, H * W), np.float32)
    for oy in (-1, 0, 1):
        for ox in (-1, 0, 1):
            k = (oy + 1) * 3 + (ox + 1)
            valid = ((yy + oy >= 0) & (yy + oy < H) &
                     (xx + ox >= 0) & (xx + ox < W))
            m[k] = valid.reshape(-1).astype(np.float32)
    return m


def mbconv_forward(x_nchw, params):
    """MBConv forward; native NCHW f32 in, NCHW f32 out (no transposes)."""
    N, Cin, H, W = x_nchw.shape
    Chid = params["w1"].shape[1]
    Cout = params["w3"].shape[1]
    residual = (Cin == Cout)
    HW = H * W

    # Fold eval-mode BN scales into the conv weights; channel-major layout.
    w1t = (params["w1"] * params["s1"][None, :]).T.astype(jnp.bfloat16)  # (Chid, Cin)
    dwt = (params["dw"] * params["s2"][None, :]).T                       # (Chid, 9) f32
    w3t = (params["w3"] * params["s3"][None, :]).T.astype(jnp.bfloat16)  # (Cout, Chid)
    b1 = params["b1"].reshape(Chid, 1)
    b2 = params["b2"].reshape(Chid, 1)
    b3 = params["b3"].reshape(Cout, 1)
    sew1t = params["sew1"].T                 # (red, Chid)
    seb1 = params["seb1"].reshape(-1, 1)     # (red, 1)
    sew2t = params["sew2"].T                 # (Chid, red)
    seb2 = params["seb2"].reshape(Chid, 1)
    masks = jnp.asarray(_halo_masks(H, W))   # (9, H*W)

    x2 = x_nchw.reshape(N, Cin, HW)          # contiguous reshape: free

    ins = [x2, w1t, b1, dwt, masks, b2, sew1t, seb1, sew2t, seb2, w3t, b3]

    def const_spec(a):
        nd = a.ndim
        return pl.BlockSpec(a.shape, lambda n, _nd=nd: (0,) * _nd)

    in_specs = [pl.BlockSpec((1, Cin, HW), lambda n: (n, 0, 0))]
    in_specs += [const_spec(a) for a in ins[1:]]

    out = pl.pallas_call(
        functools.partial(mbconv_kernel, H=H, W=W, residual=residual),
        out_shape=jax.ShapeDtypeStruct((N, Cout, HW), jnp.float32),
        grid=(N,),
        in_specs=in_specs,
        out_specs=pl.BlockSpec((1, Cout, HW), lambda n: (n, 0, 0)),
        compiler_params=pltpu.CompilerParams(
            dimension_semantics=("parallel",),       # batch across TCs (v7x)
            vmem_limit_bytes=64 * 1024 * 1024,
        ),
    )(*ins)
    return out.reshape(N, Cout, H, W)


def mbconv_reference(x_nchw, params):
    """Pure-JAX f32 reference of the same math (unfolded BN scale/bias)."""
    x = jnp.transpose(x_nchw, (0, 2, 3, 1))
    N, H, W, Cin = x.shape
    h1 = _silu(jnp.einsum("nhwc,cd->nhwd", x, params["w1"]) * params["s1"]
               + params["b1"])
    hp = jnp.pad(h1, ((0, 0), (1, 1), (1, 1), (0, 0)))
    acc = jnp.zeros_like(h1)
    for dy in range(3):
        for dx in range(3):
            acc = acc + hp[:, dy:dy + H, dx:dx + W, :] * params["dw"][dy * 3 + dx]
    h2 = _silu(acc * params["s2"] + params["b2"])
    pooled = jnp.mean(h2, axis=(1, 2))
    se = jax.nn.relu(pooled @ params["sew1"] + params["seb1"])
    se = jax.nn.sigmoid(se @ params["sew2"] + params["seb2"])
    h3 = h2 * se[:, None, None, :]
    h4 = _silu(jnp.einsum("nhwc,cd->nhwd", h3, params["w3"]) * params["s3"]
               + params["b3"])
    if h4.shape[-1] == Cin:
        h4 = h4 + x
    return jnp.transpose(h4, (0, 3, 1, 2))


def init_params(key, in_channels, out_channels, expansion=6, reduction_ratio=4):
    hidden = expansion * in_channels
    # Matches the PyTorch module (degenerate =0 for in_channels < 4).
    red = int(in_channels / reduction_ratio)
    ks = jax.random.split(key, 13)

    def rnd(k, shape, scale=0.1):
        return scale * jax.random.normal(k, shape, dtype=jnp.float32)

    eps = 1e-5

    def fold_bn(gamma, beta):
        # eval-mode BN with fresh running stats: mean=0, var=1
        return gamma / jnp.sqrt(1.0 + eps), beta

    p = {}
    # pointwise expand (Cin -> hidden), stored (Cin, hidden)
    p["w1"] = rnd(ks[0], (in_channels, hidden))
    p["s1"], p["b1"] = fold_bn(1.0 + rnd(ks[1], (hidden,)), rnd(ks[2], (hidden,)))
    # depthwise 3x3 weights, flattened as (9, hidden)
    p["dw"] = rnd(ks[3], (9, hidden))
    p["s2"], p["b2"] = fold_bn(1.0 + rnd(ks[4], (hidden,)), rnd(ks[5], (hidden,)))
    # SE 1x1 convs (with bias)
    p["sew1"] = rnd(ks[6], (hidden, red))
    p["seb1"] = rnd(ks[7], (red,))
    p["sew2"] = rnd(ks[8], (red, hidden))
    p["seb2"] = rnd(ks[9], (hidden,))
    # pointwise project (hidden -> Cout)
    p["w3"] = rnd(ks[10], (hidden, out_channels))
    p["s3"], p["b3"] = fold_bn(1.0 + rnd(ks[11], (out_channels,)),
                               rnd(ks[12], (out_channels,)))
    return p


if __name__ == "__main__":
    key = jax.random.PRNGKey(0)
    kx, kp = jax.random.split(key)

    # small shapes: batch=2, in_channels=8, 16x16 spatial, expansion=6 -> hidden=48
    N, Cin, H, W = 2, 8, 16, 16
    Cout = 8  # == Cin -> residual path active

    x = jax.random.normal(kx, (N, Cin, H, W), dtype=jnp.float32)
    params = init_params(kp, Cin, Cout)

    out = jax.block_until_ready(mbconv_forward(x, params))
    assert out.shape == (N, Cout, H, W)

    ref = mbconv_reference(x, params)
    np.testing.assert_allclose(np.asarray(out), np.asarray(ref),
                               rtol=2e-2, atol=2e-2)
    print("KERNEL_OK")
</pallas_src>

<mosaic_0001>
module attributes {stable_mosaic.version = 11 : i64} {
  func.func @mbconv_kernel(%arg0: i32, %arg1: memref<1x8x256xf32, #tpu.memory_space<vmem>>, %arg2: memref<48x8xbf16, #tpu.memory_space<vmem>>, %arg3: memref<48x1xf32, #tpu.memory_space<vmem>>, %arg4: memref<48x9xf32, #tpu.memory_space<vmem>>, %arg5: memref<9x256xf32, #tpu.memory_space<vmem>>, %arg6: memref<48x1xf32, #tpu.memory_space<vmem>>, %arg7: memref<2x48xf32, #tpu.memory_space<vmem>>, %arg8: memref<2x1xf32, #tpu.memory_space<vmem>>, %arg9: memref<48x2xf32, #tpu.memory_space<vmem>>, %arg10: memref<48x1xf32, #tpu.memory_space<vmem>>, %arg11: memref<8x48xbf16, #tpu.memory_space<vmem>>, %arg12: memref<8x1xf32, #tpu.memory_space<vmem>>, %arg13: memref<1x8x256xf32, #tpu.memory_space<vmem>>) attributes {dimension_semantics = [#tpu.dimension_semantics<parallel>], iteration_bounds = array<i64: 2>, scalar_prefetch = 0 : i64, scratch_operands = 0 : i64, tpu.core_type = #tpu.core_type<tc>, window_params = [{transform_indices = @transform_0, window_bounds = array<i64: 1, 8, 256>}, {pipeline_mode = #tpu.pipeline_mode<synchronous>, transform_indices = @transform_1, window_bounds = array<i64: 48, 8>}, {pipeline_mode = #tpu.pipeline_mode<synchronous>, transform_indices = @transform_2, window_bounds = array<i64: 48, 1>}, {pipeline_mode = #tpu.pipeline_mode<synchronous>, transform_indices = @transform_3, window_bounds = array<i64: 48, 9>}, {pipeline_mode = #tpu.pipeline_mode<synchronous>, transform_indices = @transform_4, window_bounds = array<i64: 9, 256>}, {pipeline_mode = #tpu.pipeline_mode<synchronous>, transform_indices = @transform_5, window_bounds = array<i64: 48, 1>}, {pipeline_mode = #tpu.pipeline_mode<synchronous>, transform_indices = @transform_6, window_bounds = array<i64: 2, 48>}, {pipeline_mode = #tpu.pipeline_mode<synchronous>, transform_indices = @transform_7, window_bounds = array<i64: 2, 1>}, {pipeline_mode = #tpu.pipeline_mode<synchronous>, transform_indices = @transform_8, window_bounds = array<i64: 48, 2>}, {pipeline_mode = #tpu.pipeline_mode<synchronous>, transform_indices = @transform_9, window_bounds = array<i64: 48, 1>}, {pipeline_mode = #tpu.pipeline_mode<synchronous>, transform_indices = @transform_10, window_bounds = array<i64: 8, 48>}, {pipeline_mode = #tpu.pipeline_mode<synchronous>, transform_indices = @transform_11, window_bounds = array<i64: 8, 1>}, {transform_indices = @transform_12, window_bounds = array<i64: 1, 8, 256>}]} {
    %c0 = arith.constant 0 : index
    %c0_0 = arith.constant 0 : index
    %c0_1 = arith.constant 0 : index
    %0 = vector.load %arg1[%c0, %c0_0, %c0_1] : memref<1x8x256xf32, #tpu.memory_space<vmem>>, vector<1x8x256xf32>
    %1 = vector.shape_cast %0 : vector<1x8x256xf32> to vector<8x256xf32>
    %c0_2 = arith.constant 0 : index
    %c0_3 = arith.constant 0 : index
    %2 = vector.load %arg2[%c0_2, %c0_3] : memref<48x8xbf16, #tpu.memory_space<vmem>>, vector<48x8xbf16>
    %3 = arith.truncf %1 : vector<8x256xf32> to vector<8x256xbf16>
    %cst = arith.constant dense<0.000000e+00> : vector<48x256xf32>
    %4 = tpu.matmul %2, %3, %cst {dimension_numbers = #tpu.dot_dimension_numbers<[1], [0], [0], [1], [0, 0, 1, 1], [], []>} : vector<48x8xbf16>, vector<8x256xbf16>, vector<48x256xf32> -> vector<48x256xf32>
    %c0_4 = arith.constant 0 : index
    %c0_5 = arith.constant 0 : index
    %5 = vector.load %arg3[%c0_4, %c0_5] : memref<48x1xf32, #tpu.memory_space<vmem>>, vector<48x1xf32>
    %6 = vector.broadcast %5 : vector<48x1xf32> to vector<48x256xf32>
    %7 = arith.addf %4, %6 : vector<48x256xf32>
    %8 = arith.negf %7 : vector<48x256xf32>
    %9 = math.exp %8 : vector<48x256xf32>
    %cst_6 = arith.constant 1.000000e+00 : f32
    %10 = vector.broadcast %cst_6 : f32 to vector<48x256xf32>
    %11 = arith.addf %10, %9 : vector<48x256xf32>
    %12 = arith.divf %10, %11 : vector<48x256xf32>
    %13 = arith.mulf %7, %12 : vector<48x256xf32>
    %c0_7 = arith.constant 0 : index
    %c0_8 = arith.constant 0 : index
    %14 = vector.load %arg4[%c0_7, %c0_8] : memref<48x9xf32, #tpu.memory_space<vmem>>, vector<48x9xf32>
    %c0_9 = arith.constant 0 : index
    %c0_10 = arith.constant 0 : index
    %15 = vector.load %arg5[%c0_9, %c0_10] : memref<9x256xf32, #tpu.memory_space<vmem>>, vector<9x256xf32>
    %c17_i32 = arith.constant 17 : i32
    %16 = tpu.dynamic_rotate %13 by %c17_i32 dim 1 : vector<48x256xf32>, i32 -> vector<48x256xf32>
    %17 = vector.extract_strided_slice %14 {offsets = [0, 0], sizes = [48, 1], strides = [1, 1]} : vector<48x9xf32> to vector<48x1xf32>
    %18 = vector.broadcast %17 : vector<48x1xf32> to vector<48x256xf32>
    %19 = arith.mulf %16, %18 : vector<48x256xf32>
    %20 = vector.extract_strided_slice %15 {offsets = [0, 0], sizes = [1, 256], strides = [1, 1]} : vector<9x256xf32> to vector<1x256xf32>
    %21 = vector.broadcast %20 : vector<1x256xf32> to vector<48x256xf32>
    %22 = arith.mulf %19, %21 : vector<48x256xf32>
    %c16_i32 = arith.constant 16 : i32
    %23 = tpu.dynamic_rotate %13 by %c16_i32 dim 1 : vector<48x256xf32>, i32 -> vector<48x256xf32>
    %24 = vector.extract_strided_slice %14 {offsets = [0, 1], sizes = [48, 1], strides = [1, 1]} : vector<48x9xf32> to vector<48x1xf32>
    %25 = vector.broadcast %24 : vector<48x1xf32> to vector<48x256xf32>
    %26 = arith.mulf %23, %25 : vector<48x256xf32>
    %27 = vector.extract_strided_slice %15 {offsets = [1, 0], sizes = [1, 256], strides = [1, 1]} : vector<9x256xf32> to vector<1x256xf32>
    %28 = vector.broadcast %27 : vector<1x256xf32> to vector<48x256xf32>
    %29 = arith.mulf %26, %28 : vector<48x256xf32>
    %30 = arith.addf %22, %29 : vector<48x256xf32>
    %c15_i32 = arith.constant 15 : i32
    %31 = tpu.dynamic_rotate %13 by %c15_i32 dim 1 : vector<48x256xf32>, i32 -> vector<48x256xf32>
    %32 = vector.extract_strided_slice %14 {offsets = [0, 2], sizes = [48, 1], strides = [1, 1]} : vector<48x9xf32> to vector<48x1xf32>
    %33 = vector.broadcast %32 : vector<48x1xf32> to vector<48x256xf32>
    %34 = arith.mulf %31, %33 : vector<48x256xf32>
    %35 = vector.extract_strided_slice %15 {offsets = [2, 0], sizes = [1, 256], strides = [1, 1]} : vector<9x256xf32> to vector<1x256xf32>
    %36 = vector.broadcast %35 : vector<1x256xf32> to vector<48x256xf32>
    %37 = arith.mulf %34, %36 : vector<48x256xf32>
    %38 = arith.addf %30, %37 : vector<48x256xf32>
    %c1_i32 = arith.constant 1 : i32
    %39 = tpu.dynamic_rotate %13 by %c1_i32 dim 1 : vector<48x256xf32>, i32 -> vector<48x256xf32>
    %40 = vector.extract_strided_slice %14 {offsets = [0, 3], sizes = [48, 1], strides = [1, 1]} : vector<48x9xf32> to vector<48x1xf32>
    %41 = vector.broadcast %40 : vector<48x1xf32> to vector<48x256xf32>
    %42 = arith.mulf %39, %41 : vector<48x256xf32>
    %43 = vector.extract_strided_slice %15 {offsets = [3, 0], sizes = [1, 256], strides = [1, 1]} : vector<9x256xf32> to vector<1x256xf32>
    %44 = vector.broadcast %43 : vector<1x256xf32> to vector<48x256xf32>
    %45 = arith.mulf %42, %44 : vector<48x256xf32>
    %46 = arith.addf %38, %45 : vector<48x256xf32>
    %47 = vector.extract_strided_slice %14 {offsets = [0, 4], sizes = [48, 1], strides = [1, 1]} : vector<48x9xf32> to vector<48x1xf32>
    %48 = vector.broadcast %47 : vector<48x1xf32> to vector<48x256xf32>
    %49 = arith.mulf %13, %48 : vector<48x256xf32>
    %50 = arith.addf %46, %49 : vector<48x256xf32>
    %c255_i32 = arith.constant 255 : i32
    %51 = tpu.dynamic_rotate %13 by %c255_i32 dim 1 : vector<48x256xf32>, i32 -> vector<48x256xf32>
    %52 = vector.extract_strided_slice %14 {offsets = [0, 5], sizes = [48, 1], strides = [1, 1]} : vector<48x9xf32> to vector<48x1xf32>
    %53 = vector.broadcast %52 : vector<48x1xf32> to vector<48x256xf32>
    %54 = arith.mulf %51, %53 : vector<48x256xf32>
    %55 = vector.extract_strided_slice %15 {offsets = [5, 0], sizes = [1, 256], strides = [1, 1]} : vector<9x256xf32> to vector<1x256xf32>
    %56 = vector.broadcast %55 : vector<1x256xf32> to vector<48x256xf32>
    %57 = arith.mulf %54, %56 : vector<48x256xf32>
    %58 = arith.addf %50, %57 : vector<48x256xf32>
    %c241_i32 = arith.constant 241 : i32
    %59 = tpu.dynamic_rotate %13 by %c241_i32 dim 1 : vector<48x256xf32>, i32 -> vector<48x256xf32>
    %60 = vector.extract_strided_slice %14 {offsets = [0, 6], sizes = [48, 1], strides = [1, 1]} : vector<48x9xf32> to vector<48x1xf32>
    %61 = vector.broadcast %60 : vector<48x1xf32> to vector<48x256xf32>
    %62 = arith.mulf %59, %61 : vector<48x256xf32>
    %63 = vector.extract_strided_slice %15 {offsets = [6, 0], sizes = [1, 256], strides = [1, 1]} : vector<9x256xf32> to vector<1x256xf32>
    %64 = vector.broadcast %63 : vector<1x256xf32> to vector<48x256xf32>
    %65 = arith.mulf %62, %64 : vector<48x256xf32>
    %66 = arith.addf %58, %65 : vector<48x256xf32>
    %c240_i32 = arith.constant 240 : i32
    %67 = tpu.dynamic_rotate %13 by %c240_i32 dim 1 : vector<48x256xf32>, i32 -> vector<48x256xf32>
    %68 = vector.extract_strided_slice %14 {offsets = [0, 7], sizes = [48, 1], strides = [1, 1]} : vector<48x9xf32> to vector<48x1xf32>
    %69 = vector.broadcast %68 : vector<48x1xf32> to vector<48x256xf32>
    %70 = arith.mulf %67, %69 : vector<48x256xf32>
    %71 = vector.extract_strided_slice %15 {offsets = [7, 0], sizes = [1, 256], strides = [1, 1]} : vector<9x256xf32> to vector<1x256xf32>
    %72 = vector.broadcast %71 : vector<1x256xf32> to vector<48x256xf32>
    %73 = arith.mulf %70, %72 : vector<48x256xf32>
    %74 = arith.addf %66, %73 : vector<48x256xf32>
    %c239_i32 = arith.constant 239 : i32
    %75 = tpu.dynamic_rotate %13 by %c239_i32 dim 1 : vector<48x256xf32>, i32 -> vector<48x256xf32>
    %76 = vector.extract_strided_slice %14 {offsets = [0, 8], sizes = [48, 1], strides = [1, 1]} : vector<48x9xf32> to vector<48x1xf32>
    %77 = vector.broadcast %76 : vector<48x1xf32> to vector<48x256xf32>
    %78 = arith.mulf %75, %77 : vector<48x256xf32>
    %79 = vector.extract_strided_slice %15 {offsets = [8, 0], sizes = [1, 256], strides = [1, 1]} : vector<9x256xf32> to vector<1x256xf32>
    %80 = vector.broadcast %79 : vector<1x256xf32> to vector<48x256xf32>
    %81 = arith.mulf %78, %80 : vector<48x256xf32>
    %82 = arith.addf %74, %81 : vector<48x256xf32>
    %c0_11 = arith.constant 0 : index
    %c0_12 = arith.constant 0 : index
    %83 = vector.load %arg6[%c0_11, %c0_12] : memref<48x1xf32, #tpu.memory_space<vmem>>, vector<48x1xf32>
    %84 = vector.broadcast %83 : vector<48x1xf32> to vector<48x256xf32>
    %85 = arith.addf %82, %84 : vector<48x256xf32>
    %86 = arith.negf %85 : vector<48x256xf32>
    %87 = math.exp %86 : vector<48x256xf32>
    %cst_13 = arith.constant 1.000000e+00 : f32
    %88 = vector.broadcast %cst_13 : f32 to vector<48x256xf32>
    %89 = arith.addf %88, %87 : vector<48x256xf32>
    %90 = arith.divf %88, %89 : vector<48x256xf32>
    %91 = arith.mulf %85, %90 : vector<48x256xf32>
    %cst_14 = arith.constant dense<0.000000e+00> : vector<48xf32>
    %92 = vector.multi_reduction <add>, %91, %cst_14 [1] : vector<48x256xf32> to vector<48xf32>
    %93 = vector.shape_cast %92 : vector<48xf32> to vector<48x1xf32>
    %cst_15 = arith.constant 2.560000e+02 : f32
    %94 = vector.broadcast %cst_15 : f32 to vector<48x1xf32>
    %95 = arith.divf %93, %94 : vector<48x1xf32>
    %c0_16 = arith.constant 0 : index
    %c0_17 = arith.constant 0 : index
    %96 = vector.load %arg7[%c0_16, %c0_17] : memref<2x48xf32, #tpu.memory_space<vmem>>, vector<2x48xf32>
    %cst_18 = arith.constant dense<0.000000e+00> : vector<2x1xf32>
    %97 = tpu.matmul %96, %95, %cst_18 {dimension_numbers = #tpu.dot_dimension_numbers<[1], [0], [0], [1], [0, 0, 1, 1], [], []>} : vector<2x48xf32>, vector<48x1xf32>, vector<2x1xf32> -> vector<2x1xf32>
    %c0_19 = arith.constant 0 : index
    %c0_20 = arith.constant 0 : index
    %98 = vector.load %arg8[%c0_19, %c0_20] : memref<2x1xf32, #tpu.memory_space<vmem>>, vector<2x1xf32>
    %99 = arith.addf %97, %98 : vector<2x1xf32>
    %cst_21 = arith.constant 0.000000e+00 : f32
    %100 = vector.broadcast %cst_21 : f32 to vector<2x1xf32>
    %101 = arith.maximumf %99, %100 : vector<2x1xf32>
    %c0_22 = arith.constant 0 : index
    %c0_23 = arith.constant 0 : index
    %102 = vector.load %arg9[%c0_22, %c0_23] : memref<48x2xf32, #tpu.memory_space<vmem>>, vector<48x2xf32>
    %cst_24 = arith.constant dense<0.000000e+00> : vector<48x1xf32>
    %103 = tpu.matmul %102, %101, %cst_24 {dimension_numbers = #tpu.dot_dimension_numbers<[1], [0], [0], [1], [0, 0, 1, 1], [], []>} : vector<48x2xf32>, vector<2x1xf32>, vector<48x1xf32> -> vector<48x1xf32>
    %c0_25 = arith.constant 0 : index
    %c0_26 = arith.constant 0 : index
    %104 = vector.load %arg10[%c0_25, %c0_26] : memref<48x1xf32, #tpu.memory_space<vmem>>, vector<48x1xf32>
    %105 = arith.addf %103, %104 : vector<48x1xf32>
    %106 = arith.negf %105 : vector<48x1xf32>
    %107 = math.exp %106 : vector<48x1xf32>
    %cst_27 = arith.constant 1.000000e+00 : f32
    %108 = vector.broadcast %cst_27 : f32 to vector<48x1xf32>
    %109 = arith.addf %108, %107 : vector<48x1xf32>
    %110 = arith.divf %108, %109 : vector<48x1xf32>
    %111 = vector.broadcast %110 : vector<48x1xf32> to vector<48x256xf32>
    %112 = arith.mulf %91, %111 : vector<48x256xf32>
    %c0_28 = arith.constant 0 : index
    %c0_29 = arith.constant 0 : index
    %113 = vector.load %arg11[%c0_28, %c0_29] : memref<8x48xbf16, #tpu.memory_space<vmem>>, vector<8x48xbf16>
    %114 = arith.truncf %112 : vector<48x256xf32> to vector<48x256xbf16>
    %cst_30 = arith.constant dense<0.000000e+00> : vector<8x256xf32>
    %115 = tpu.matmul %113, %114, %cst_30 {dimension_numbers = #tpu.dot_dimension_numbers<[1], [0], [0], [1], [0, 0, 1, 1], [], []>} : vector<8x48xbf16>, vector<48x256xbf16>, vector<8x256xf32> -> vector<8x256xf32>
    %c0_31 = arith.constant 0 : index
    %c0_32 = arith.constant 0 : index
    %116 = vector.load %arg12[%c0_31, %c0_32] : memref<8x1xf32, #tpu.memory_space<vmem>>, vector<8x1xf32>
    %117 = vector.broadcast %116 : vector<8x1xf32> to vector<8x256xf32>
    %118 = arith.addf %115, %117 : vector<8x256xf32>
    %119 = arith.negf %118 : vector<8x256xf32>
    %120 = math.exp %119 : vector<8x256xf32>
    %cst_33 = arith.constant 1.000000e+00 : f32
    %121 = vector.broadcast %cst_33 : f32 to vector<8x256xf32>
    %122 = arith.addf %121, %120 : vector<8x256xf32>
    %123 = arith.divf %121, %122 : vector<8x256xf32>
    %124 = arith.mulf %118, %123 : vector<8x256xf32>
    %125 = arith.addf %124, %1 : vector<8x256xf32>
    %c0_34 = arith.constant 0 : index
    %c0_35 = arith.constant 0 : index
    %c0_36 = arith.constant 0 : index
    %126 = vector.load %arg13[%c0_34, %c0_35, %c0_36] : memref<1x8x256xf32, #tpu.memory_space<vmem>>, vector<1x8x256xf32>
    %127 = vector.shape_cast %126 : vector<1x8x256xf32> to vector<8x256xf32>
    %128 = vector.shape_cast %125 : vector<8x256xf32> to vector<1x8x256xf32>
    tpu.vector_store %arg13[%c0_34, %c0_35, %c0_36], %128 {strides = array<i32>} : memref<1x8x256xf32, #tpu.memory_space<vmem>>, vector<1x8x256xf32>,
    return
  }
  func.func @transform_0(%arg0: i32) -> (i32, i32, i32) {
    %c0_i32 = arith.constant 0 : i32
    %c0_i32_0 = arith.constant 0 : i32
    %c0_i32_1 = arith.constant 0 : i32
    return %arg0, %c0_i32, %c0_i32_0 : i32, i32, i32
  }
  func.func @transform_1(%arg0: i32) -> (i32, i32) {
    %c0_i32 = arith.constant 0 : i32
    %c0_i32_0 = arith.constant 0 : i32
    %c0_i32_1 = arith.constant 0 : i32
    return %c0_i32, %c0_i32_0 : i32, i32
  }
  func.func @transform_2(%arg0: i32) -> (i32, i32) {
    %c0_i32 = arith.constant 0 : i32
    %c0_i32_0 = arith.constant 0 : i32
    %c0_i32_1 = arith.constant 0 : i32
    return %c0_i32, %c0_i32_0 : i32, i32
  }
  func.func @transform_3(%arg0: i32) -> (i32, i32) {
    %c0_i32 = arith.constant 0 : i32
    %c0_i32_0 = arith.constant 0 : i32
    %c0_i32_1 = arith.constant 0 : i32
    return %c0_i32, %c0_i32_0 : i32, i32
  }
  func.func @transform_4(%arg0: i32) -> (i32, i32) {
    %c0_i32 = arith.constant 0 : i32
    %c0_i32_0 = arith.constant 0 : i32
    %c0_i32_1 = arith.constant 0 : i32
    return %c0_i32, %c0_i32_0 : i32, i32
  }
  func.func @transform_5(%arg0: i32) -> (i32, i32) {
    %c0_i32 = arith.constant 0 : i32
    %c0_i32_0 = arith.constant 0 : i32
    %c0_i32_1 = arith.constant 0 : i32
    return %c0_i32, %c0_i32_0 : i32, i32
  }
  func.func @transform_6(%arg0: i32) -> (i32, i32) {
    %c0_i32 = arith.constant 0 : i32
    %c0_i32_0 = arith.constant 0 : i32
    %c0_i32_1 = arith.constant 0 : i32
    return %c0_i32, %c0_i32_0 : i32, i32
  }
  func.func @transform_7(%arg0: i32) -> (i32, i32) {
    %c0_i32 = arith.constant 0 : i32
    %c0_i32_0 = arith.constant 0 : i32
    %c0_i32_1 = arith.constant 0 : i32
    return %c0_i32, %c0_i32_0 : i32, i32
  }
  func.func @transform_8(%arg0: i32) -> (i32, i32) {
    %c0_i32 = arith.constant 0 : i32
    %c0_i32_0 = arith.constant 0 : i32
    %c0_i32_1 = arith.constant 0 : i32
    return %c0_i32, %c0_i32_0 : i32, i32
  }
  func.func @transform_9(%arg0: i32) -> (i32, i32) {
    %c0_i32 = arith.constant 0 : i32
    %c0_i32_0 = arith.constant 0 : i32
    %c0_i32_1 = arith.constant 0 : i32
    return %c0_i32, %c0_i32_0 : i32, i32
  }
  func.func @transform_10(%arg0: i32) -> (i32, i32) {
    %c0_i32 = arith.constant 0 : i32
    %c0_i32_0 = arith.constant 0 : i32
    %c0_i32_1 = arith.constant 0 : i32
    return %c0_i32, %c0_i32_0 : i32, i32
  }
  func.func @transform_11(%arg0: i32) -> (i32, i32) {
    %c0_i32 = arith.constant 0 : i32
    %c0_i32_0 = arith.constant 0 : i32
    %c0_i32_1 = arith.constant 0 : i32
    return %c0_i32, %c0_i32_0 : i32, i32
  }
  func.func @transform_12(%arg0: i32) -> (i32, i32, i32) {
    %c0_i32 = arith.constant 0 : i32
    %c0_i32_0 = arith.constant 0 : i32
    %c0_i32_1 = arith.constant 0 : i32
    return %arg0, %c0_i32, %c0_i32_0 : i32, i32, i32
  }
}

</mosaic_0001>

<llo_original>
// kernel: tpu_custom_call.1
$region0: #{tpu_custom_call.1}
  #allocation0 [shape = 'u32[]', space=smem, size = 0x4, offset = 0x4, fixed_abs, tag = 'smem constant byte address 0x4 - core index']
  #allocation1 [shape = 'u32[144,128]{1,0:T(1,128)}', space=vmem, size = 0x12000, scoped, tag = 'internal scratch']
  %s0 = inlined_call_operand.hbm [shape: f32[2,8,256], index: 0, kind: input, shape index: {}]
  %s1 = inlined_call_operand.hbm [shape: bf16[48,8], index: 1, kind: input, shape index: {}]
  %s2 = inlined_call_operand.hbm [shape: f32[48,1], index: 2, kind: input, shape index: {}]
  %s3 = inlined_call_operand.hbm [shape: f32[48,9], index: 3, kind: input, shape index: {}]
  %s4 = inlined_call_operand.hbm [shape: f32[9,256], index: 4, kind: input, shape index: {}]
  %s5 = inlined_call_operand.hbm [shape: f32[48,1], index: 5, kind: input, shape index: {}]
  %s6 = inlined_call_operand.hbm [shape: f32[2,48], index: 6, kind: input, shape index: {}]
  %s7 = inlined_call_operand.hbm [shape: f32[2,1], index: 7, kind: input, shape index: {}]
  %s8 = inlined_call_operand.hbm [shape: f32[48,2], index: 8, kind: input, shape index: {}]
  %s9 = inlined_call_operand.hbm [shape: f32[48,1], index: 9, kind: input, shape index: {}]
  %s10 = inlined_call_operand.hbm [shape: bf16[8,48], index: 10, kind: input, shape index: {}]
  %s11 = inlined_call_operand.hbm [shape: f32[8,1], index: 11, kind: input, shape index: {}]
  %s12 = inlined_call_operand.hbm [shape: f32[2,8,256], index: 12, kind: output, shape index: {}]
  %s13 = sld [smem:[#allocation0]]
  $region129: #{tpu_custom_call.1} parent=0
    _
  %s15 = ssub.s32 1, %s13
  %s16 = scalar_select 0, %s15, %s13
  $region1: #{tpu_custom_call.1} parent=0
    #allocation2 [shape = 'u8[16384]{0}', space=vmem, size = 0x4000, scoped, tag = 'input window, operand 0']
    #allocation3 [shape = 's32[2]{0}', space=sflag, size = 0x8, scoped, tag = 'scoped memory for tpu_custom_call.1']
    #allocation4 [shape = 's32[2]{0}', space=sflag, size = 0x8, scoped, tag = 'scoped memory for tpu_custom_call.1']
    #allocation5 [shape = 'u8[12288]{0}', space=vmem, size = 0x3000, scoped, tag = 'input window, operand 1, single buffered']
    #allocation6 [shape = 's32[1]{0}', space=sflag, size = 0x4, scoped, tag = 'scoped memory for tpu_custom_call.1']
    #allocation7 [shape = 'u8[24576]{0}', space=vmem, size = 0x6000, scoped, tag = 'input window, operand 2, single buffered']
    #allocation8 [shape = 'u8[24576]{0}', space=vmem, size = 0x6000, scoped, tag = 'input window, operand 3, single buffered']
    #allocation9 [shape = 's32[1]{0}', space=sflag, size = 0x4, scoped, tag = 'scoped memory for tpu_custom_call.1']
    #allocation10 [shape = 'u8[16384]{0}', space=vmem, size = 0x4000, scoped, tag = 'input window, operand 4, single buffered']
    #allocation11 [shape = 'u8[24576]{0}', space=vmem, size = 0x6000, scoped, tag = 'input window, operand 5, single buffered']
    #allocation12 [shape = 's32[1]{0}', space=sflag, size = 0x4, scoped, tag = 'scoped memory for tpu_custom_call.1']
    #allocation13 [shape = 'u8[1024]{0}', space=vmem, size = 0x400, scoped, tag = 'input window, operand 6, single buffered']
    #allocation14 [shape = 'u8[1024]{0}', space=vmem, size = 0x400, scoped, tag = 'input window, operand 7, single buffered']
    #allocation15 [shape = 's32[1]{0}', space=sflag, size = 0x4, scoped, tag = 'scoped memory for tpu_custom_call.1']
    #allocation16 [shape = 'u8[24576]{0}', space=vmem, size = 0x6000, scoped, tag = 'input window, operand 8, single buffered']
    #allocation17 [shape = 'u8[24576]{0}', space=vmem, size = 0x6000, scoped, tag = 'input window, operand 9, single buffered']
    #allocation18 [shape = 's32[1]{0}', space=sflag, size = 0x4, scoped, tag = 'scoped memory for tpu_custom_call.1']
    #allocation19 [shape = 'u8[2048]{0}', space=vmem, size = 0x800, scoped, tag = 'input window, operand 10, single buffered']
    #allocation20 [shape = 'u8[4096]{0}', space=vmem, size = 0x1000, scoped, tag = 'input window, operand 11, single buffered']
    #allocation21 [shape = 's32[1]{0}', space=sflag, size = 0x4, scoped, tag = 'scoped memory for tpu_custom_call.1']
    #allocation22 [shape = 'u8[16384]{0}', space=vmem, size = 0x4000, scoped, tag = 'output window, operand 0']
    %17 = vsyncpa [#allocation3], 0
    %s18 = scalar_lea.sflag [#allocation3], 1
    %19 = vsyncpa %s18, 0
    %20 = vsyncpa [#allocation6], 0
    %21 = vsyncpa [#allocation9], 0
    %22 = vsyncpa [#allocation12], 0
    %23 = vsyncpa [#allocation15], 0
    %24 = vsyncpa [#allocation18], 0
    %25 = vsyncpa [#allocation21], 0
    %26 = vsyncpa [#allocation4], 0
    %s27 = scalar_lea.sflag [#allocation4], 1
    %28 = vsyncpa %s27, 0
    loop: start=0, step=1, limit=4
    $region2: #{tpu_custom_call.1} parent=1 // loop_pre_header
      _
    $region3: #{tpu_custom_call.1} parent=1 // loop_header
      %s30 = sphi 0, %s34
      %p31 = scmp.ge.s32.totalorder %s30, 4
      %s40 = sphi 0, %s42
      %s43 = sphi 0, %s40
      %s44 = sphi 0, %s43
      %s60 = sphi 0, %s44
      %s64 = sphi 0, %s64
      %s66 = sphi 0, %s64
      %s67 = sphi 0, %s66
      %s81 = sphi 0, %s67
      %s85 = sphi 0, %s85
      %s87 = sphi 0, %s85
      %s88 = sphi 0, %s87
      %s102 = sphi 0, %s88
      %s106 = sphi 0, %s106
      %s108 = sphi 0, %s106
      %s109 = sphi 0, %s108
      %s123 = sphi 0, %s109
      %s127 = sphi 0, %s127
      %s129 = sphi 0, %s127
      %s130 = sphi 0, %s129
      %s144 = sphi 0, %s130
      %s148 = sphi 0, %s148
      %s150 = sphi 0, %s148
      %s151 = sphi 0, %s150
      %s165 = sphi 0, %s151
      %s169 = sphi 0, %s169
      %s171 = sphi 0, %s169
      %s172 = sphi 0, %s171
      %s186 = sphi 0, %s172
      %s190 = sphi 0, %s190
      %s192 = sphi 0, %s190
      %s193 = sphi 0, %s192
      %s207 = sphi 0, %s193
      %s211 = sphi 0, %s211
      %s213 = sphi 0, %s211
      %s214 = sphi 0, %s213
      %s228 = sphi 0, %s214
      %s232 = sphi 0, %s232
      %s234 = sphi 0, %s232
      %s235 = sphi 0, %s234
      %s249 = sphi 0, %s235
      %s253 = sphi 0, %s253
      %s255 = sphi 0, %s253
      %s256 = sphi 0, %s255
      %s270 = sphi 0, %s256
      %s274 = sphi 0, %s274
      %s276 = sphi 0, %s274
      %s277 = sphi 0, %s276
      %s291 = sphi 0, %s277
      %s297 = sphi 0, %s299
      %s300 = sphi 0, %s297
      %s301 = sphi 0, %s300
      %s317 = sphi 0, %s301
    $region4: #{tpu_custom_call.1} parent=1 // loop_header_branch
      %33 = sbr.rel (%p31) target = $region8
    $region5: #{tpu_custom_call.1} parent=1 // loop_body
      %s35 = ssub.s32 %s30, 1
      %s36 = ssub.s32 %s30, 2
      %s37 = sadd.s32 %s30, 1
      %s38 = ssub.s32 %s30, %s37
      %p39 = scmp.eq.s32.totalorder %s38, 0
      %s41 = sadd.s32 %s40, 1
      %s42 = scalar_select %p39, %s40, %s41
      %p45 = pneg %p39
      %p46 = scmp.eq.s32.totalorder %s30, 1
      %p47 = por %p45, %p46
      %p48 = scmp.ne.s32.totalorder %s40, %s43
      %p49 = scmp.eq.s32.totalorder %s30, 0
      %p50 = por %p48, %p49
      %p51 = scmp.ne.s32.totalorder %s40, %s43
      %p52 = scmp.eq.s32.totalorder %s35, 1
      %p53 = por %p51, %p52
      %p54 = scmp.ne.s32.totalorder %s43, %s44
      %p55 = scmp.eq.s32.totalorder %s35, 0
      %p56 = por %p54, %p55
      %p57 = scmp.ne.s32.totalorder %s43, %s44
      %p58 = scmp.eq.s32.totalorder %s36, 1
      %p59 = por %p57, %p58
      %p61 = scmp.ne.s32.totalorder %s44, %s60
      %p62 = scmp.eq.s32.totalorder %s36, 0
      %p63 = por %p61, %p62
      %s65 = sadd.s32 %s64, 1
      %p68 = scmp.eq.s32.totalorder %s30, 1
      %p69 = scmp.ne.s32.totalorder %s64, %s66
      %p70 = scmp.eq.s32.totalorder %s30, 0
      %p71 = por %p69, %p70
      %p72 = scmp.ne.s32.totalorder %s64, %s66
      %p73 = scmp.eq.s32.totalorder %s35, 1
      %p74 = por %p72, %p73
      %p75 = scmp.ne.s32.totalorder %s66, %s67
      %p76 = scmp.eq.s32.totalorder %s35, 0
      %p77 = por %p75, %p76
      %p78 = scmp.ne.s32.totalorder %s66, %s67
      %p79 = scmp.eq.s32.totalorder %s36, 1
      %p80 = por %p78, %p79
      %p82 = scmp.ne.s32.totalorder %s67, %s81
      %p83 = scmp.eq.s32.totalorder %s36, 0
      %p84 = por %p82, %p83
      %s86 = sadd.s32 %s85, 1
      %p89 = scmp.eq.s32.totalorder %s30, 1
      %p90 = scmp.ne.s32.totalorder %s85, %s87
      %p91 = scmp.eq.s32.totalorder %s30, 0
      %p92 = por %p90, %p91
      %p93 = scmp.ne.s32.totalorder %s85, %s87
      %p94 = scmp.eq.s32.totalorder %s35, 1
      %p95 = por %p93, %p94
      %p96 = scmp.ne.s32.totalorder %s87, %s88
      %p97 = scmp.eq.s32.totalorder %s35, 0
      %p98 = por %p96, %p97
      %p99 = scmp.ne.s32.totalorder %s87, %s88
      %p100 = scmp.eq.s32.totalorder %s36, 1
      %p101 = por %p99, %p100
      %p103 = scmp.ne.s32.totalorder %s88, %s102
      %p104 = scmp.eq.s32.totalorder %s36, 0
      %p105 = por %p103, %p104
      %s107 = sadd.s32 %s106, 1
      %p110 = scmp.eq.s32.totalorder %s30, 1
      %p111 = scmp.ne.s32.totalorder %s106, %s108
      %p112 = scmp.eq.s32.totalorder %s30, 0
      %p113 = por %p111, %p112
      %p114 = scmp.ne.s32.totalorder %s106, %s108
      %p115 = scmp.eq.s32.totalorder %s35, 1
      %p116 = por %p114, %p115
      %p117 = scmp.ne.s32.totalorder %s108, %s109
      %p118 = scmp.eq.s32.totalorder %s35, 0
      %p119 = por %p117, %p118
      %p120 = scmp.ne.s32.totalorder %s108, %s109
      %p121 = scmp.eq.s32.totalorder %s36, 1
      %p122 = por %p120, %p121
      %p124 = scmp.ne.s32.totalorder %s109, %s123
      %p125 = scmp.eq.s32.totalorder %s36, 0
      %p126 = por %p124, %p125
      %s128 = sadd.s32 %s127, 1
      %p131 = scmp.eq.s32.totalorder %s30, 1
      %p132 = scmp.ne.s32.totalorder %s127, %s129
      %p133 = scmp.eq.s32.totalorder %s30, 0
      %p134 = por %p132, %p133
      %p135 = scmp.ne.s32.totalorder %s127, %s129
      %p136 = scmp.eq.s32.totalorder %s35, 1
      %p137 = por %p135, %p136
      %p138 = scmp.ne.s32.totalorder %s129, %s130
      %p139 = scmp.eq.s32.totalorder %s35, 0
      %p140 = por %p138, %p139
      %p141 = scmp.ne.s32.totalorder %s129, %s130
      %p142 = scmp.eq.s32.totalorder %s36, 1
      %p143 = por %p141, %p142
      %p145 = scmp.ne.s32.totalorder %s130, %s144
      %p146 = scmp.eq.s32.totalorder %s36, 0
      %p147 = por %p145, %p146
      %s149 = sadd.s32 %s148, 1
      %p152 = scmp.eq.s32.totalorder %s30, 1
      %p153 = scmp.ne.s32.totalorder %s148, %s150
      %p154 = scmp.eq.s32.totalorder %s30, 0
      %p155 = por %p153, %p154
      %p156 = scmp.ne.s32.totalorder %s148, %s150
      %p157 = scmp.eq.s32.totalorder %s35, 1
      %p158 = por %p156, %p157
      %p159 = scmp.ne.s32.totalorder %s150, %s151
      %p160 = scmp.eq.s32.totalorder %s35, 0
      %p161 = por %p159, %p160
      %p162 = scmp.ne.s32.totalorder %s150, %s151
      %p163 = scmp.eq.s32.totalorder %s36, 1
      %p164 = por %p162, %p163
      %p166 = scmp.ne.s32.totalorder %s151, %s165
      %p167 = scmp.eq.s32.totalorder %s36, 0
      %p168 = por %p166, %p167
      %s170 = sadd.s32 %s169, 1
      %p173 = scmp.eq.s32.totalorder %s30, 1
      %p174 = scmp.ne.s32.totalorder %s169, %s171
      %p175 = scmp.eq.s32.totalorder %s30, 0
      %p176 = por %p174, %p175
      %p177 = scmp.ne.s32.totalorder %s169, %s171
      %p178 = scmp.eq.s32.totalorder %s35, 1
      %p179 = por %p177, %p178
      %p180 = scmp.ne.s32.totalorder %s171, %s172
      %p181 = scmp.eq.s32.totalorder %s35, 0
      %p182 = por %p180, %p181
      %p183 = scmp.ne.s32.totalorder %s171, %s172
      %p184 = scmp.eq.s32.totalorder %s36, 1
      %p185 = por %p183, %p184
      %p187 = scmp.ne.s32.totalorder %s172, %s186
      %p188 = scmp.eq.s32.totalorder %s36, 0
      %p189 = por %p187, %p188
      %s191 = sadd.s32 %s190, 1
      %p194 = scmp.eq.s32.totalorder %s30, 1
      %p195 = scmp.ne.s32.totalorder %s190, %s192
      %p196 = scmp.eq.s32.totalorder %s30, 0
      %p197 = por %p195, %p196
      %p198 = scmp.ne.s32.totalorder %s190, %s192
      %p199 = scmp.eq.s32.totalorder %s35, 1
      %p200 = por %p198, %p199
      %p201 = scmp.ne.s32.totalorder %s192, %s193
      %p202 = scmp.eq.s32.totalorder %s35, 0
      %p203 = por %p201, %p202
      %p204 = scmp.ne.s32.totalorder %s192, %s193
      %p205 = scmp.eq.s32.totalorder %s36, 1
      %p206 = por %p204, %p205
      %p208 = scmp.ne.s32.totalorder %s193, %s207
      %p209 = scmp.eq.s32.totalorder %s36, 0
      %p210 = por %p208, %p209
      %s212 = sadd.s32 %s211, 1
      %p215 = scmp.eq.s32.totalorder %s30, 1
      %p216 = scmp.ne.s32.totalorder %s211, %s213
      %p217 = scmp.eq.s32.totalorder %s30, 0
      %p218 = por %p216, %p217
      %p219 = scmp.ne.s32.totalorder %s211, %s213
      %p220 = scmp.eq.s32.totalorder %s35, 1
      %p221 = por %p219, %p220
      %p222 = scmp.ne.s32.totalorder %s213, %s214
      %p223 = scmp.eq.s32.totalorder %s35, 0
      %p224 = por %p222, %p223
      %p225 = scmp.ne.s32.totalorder %s213, %s214
      %p226 = scmp.eq.s32.totalorder %s36, 1
      %p227 = por %p225, %p226
      %p229 = scmp.ne.s32.totalorder %s214, %s228
      %p230 = scmp.eq.s32.totalorder %s36, 0
      %p231 = por %p229, %p230
      %s233 = sadd.s32 %s232, 1
      %p236 = scmp.eq.s32.totalorder %s30, 1
      %p237 = scmp.ne.s32.totalorder %s232, %s234
      %p238 = scmp.eq.s32.totalorder %s30, 0
      %p239 = por %p237, %p238
      %p240 = scmp.ne.s32.totalorder %s232, %s234
      %p241 = scmp.eq.s32.totalorder %s35, 1
      %p242 = por %p240, %p241
      %p243 = scmp.ne.s32.totalorder %s234, %s235
      %p244 = scmp.eq.s32.totalorder %s35, 0
      %p245 = por %p243, %p244
      %p246 = scmp.ne.s32.totalorder %s234, %s235
      %p247 = scmp.eq.s32.totalorder %s36, 1
      %p248 = por %p246, %p247
      %p250 = scmp.ne.s32.totalorder %s235, %s249
      %p251 = scmp.eq.s32.totalorder %s36, 0
      %p252 = por %p250, %p251
      %s254 = sadd.s32 %s253, 1
      %p257 = scmp.eq.s32.totalorder %s30, 1
      %p258 = scmp.ne.s32.totalorder %s253, %s255
      %p259 = scmp.eq.s32.totalorder %s30, 0
      %p260 = por %p258, %p259
      %p261 = scmp.ne.s32.totalorder %s253, %s255
      %p262 = scmp.eq.s32.totalorder %s35, 1
      %p263 = por %p261, %p262
      %p264 = scmp.ne.s32.totalorder %s255, %s256
      %p265 = scmp.eq.s32.totalorder %s35, 0
      %p266 = por %p264, %p265
      %p267 = scmp.ne.s32.totalorder %s255, %s256
      %p268 = scmp.eq.s32.totalorder %s36, 1
      %p269 = por %p267, %p268
      %p271 = scmp.ne.s32.totalorder %s256, %s270
      %p272 = scmp.eq.s32.totalorder %s36, 0
      %p273 = por %p271, %p272
      %s275 = sadd.s32 %s274, 1
      %p278 = scmp.eq.s32.totalorder %s30, 1
      %p279 = scmp.ne.s32.totalorder %s274, %s276
      %p280 = scmp.eq.s32.totalorder %s30, 0
      %p281 = por %p279, %p280
      %p282 = scmp.ne.s32.totalorder %s274, %s276
      %p283 = scmp.eq.s32.totalorder %s35, 1
      %p284 = por %p282, %p283
      %p285 = scmp.ne.s32.totalorder %s276, %s277
      %p286 = scmp.eq.s32.totalorder %s35, 0
      %p287 = por %p285, %p286
      %p288 = scmp.ne.s32.totalorder %s276, %s277
      %p289 = scmp.eq.s32.totalorder %s36, 1
      %p290 = por %p288, %p289
      %p292 = scmp.ne.s32.totalorder %s277, %s291
      %p293 = scmp.eq.s32.totalorder %s36, 0
      %p294 = por %p292, %p293
      %s295 = ssub.s32 %s30, %s37
      %p296 = scmp.eq.s32.totalorder %s295, 0
      %s298 = sadd.s32 %s297, 1
      %s299 = scalar_select %p296, %s297, %s298
      %p302 = pneg %p296
      %p303 = scmp.eq.s32.totalorder %s30, 1
      %p304 = por %p302, %p303
      %p305 = scmp.ne.s32.totalorder %s297, %s300
      %p306 = scmp.eq.s32.totalorder %s30, 0
      %p307 = por %p305, %p306
      %p308 = scmp.ne.s32.totalorder %s297, %s300
      %p309 = scmp.eq.s32.totalorder %s35, 1
      %p310 = por %p308, %p309
      %p311 = scmp.ne.s32.totalorder %s300, %s301
      %p312 = scmp.eq.s32.totalorder %s35, 0
      %p313 = por %p311, %p312
      %p314 = scmp.ne.s32.totalorder %s300, %s301
      %p315 = scmp.eq.s32.totalorder %s36, 1
      %p316 = por %p314, %p315
      %p318 = scmp.ne.s32.totalorder %s301, %s317
      %p319 = scmp.eq.s32.totalorder %s36, 0
      %p320 = por %p318, %p319
      %p321 = scmp.le.s32.totalorder 1, %s30
      %p322 = scmp.lt.s32.totalorder %s30, 3
      %p323 = pnand %p321, %p322
      %p324 = pneg %p323
      // Predicated region
      $region9: #{tpu_custom_call.1} parent=5 // pred_check
        _
      $region10: #{tpu_custom_call.1} parent=5 // pred_check_branch
        %326 = sbr.rel (%p323) target = $region12
      $region11: #{tpu_custom_call.1} parent=5 // pred_region
        %s327 = ssub.s32 %s30, 1
        // Predicated region
        $region13: #{tpu_custom_call.1} parent=11 // pred_check
          %p328 = pneg %p77
        $region14: #{tpu_custom_call.1} parent=11 // pred_check_branch
          %330 = sbr.rel (%p328) target = $region16
        $region15: #{tpu_custom_call.1} parent=11 // pred_region
          %s332 = ssub.s32 384, 384
          %333 = vsyncadd [#allocation6], %s332
          %s334 = sshll.u32 [#allocation5], 4
          %s335 = int_to_ptr.vmem [resolvable:$true] %s334
          %340 = dma.hbm_to_vmem [thread:$0]  %s1, 384, %s335, [#allocation6], 64, 64, 4
        $region16: #{tpu_custom_call.1} parent=11 // pred_fallthru
          _
        // Predicated region
        $region17: #{tpu_custom_call.1} parent=11 // pred_check
          %p341 = pneg %p98
        $region18: #{tpu_custom_call.1} parent=11 // pred_check_branch
          %343 = sbr.rel (%p341) target = $region20
        $region19: #{tpu_custom_call.1} parent=11 // pred_region
          %s345 = ssub.s32 768, 768
          %346 = vsyncadd [#allocation6], %s345
          %s347 = sshll.u32 [#allocation7], 4
          %s348 = int_to_ptr.vmem [resolvable:$true] %s347
          %353 = dma.hbm_to_vmem [thread:$0]  %s2, 768, %s348, [#allocation6], 128, 128, 8
        $region20: #{tpu_custom_call.1} parent=11 // pred_fallthru
          _
        // Predicated region
        $region21: #{tpu_custom_call.1} parent=11 // pred_check
          %p354 = pneg %p119
        $region22: #{tpu_custom_call.1} parent=11 // pred_check_branch
          %356 = sbr.rel (%p354) target = $region24
        $region23: #{tpu_custom_call.1} parent=11 // pred_region
          %s358 = ssub.s32 768, 768
          %359 = vsyncadd [#allocation9], %s358
          %s360 = sshll.u32 [#allocation8], 4
          %s361 = int_to_ptr.vmem [resolvable:$true] %s360
          %366 = dma.hbm_to_vmem [thread:$0]  %s3, 768, %s361, [#allocation9], 128, 128, 8
        $region24: #{tpu_custom_call.1} parent=11 // pred_fallthru
          _
        // Predicated region
        $region25: #{tpu_custom_call.1} parent=11 // pred_check
          %p367 = pneg %p140
        $region26: #{tpu_custom_call.1} parent=11 // pred_check_branch
          %369 = sbr.rel (%p367) target = $region28
        $region27: #{tpu_custom_call.1} parent=11 // pred_region
          %s371 = ssub.s32 512, 512
          %372 = vsyncadd [#allocation9], %s371
          %s373 = sshll.u32 [#allocation10], 4
          %s374 = int_to_ptr.vmem [resolvable:$true] %s373
          %379 = dma.hbm_to_vmem [thread:$0]  %s4, 512, %s374, [#allocation9], 256, 256, 16
        $region28: #{tpu_custom_call.1} parent=11 // pred_fallthru
          _
        // Predicated region
        $region29: #{tpu_custom_call.1} parent=11 // pred_check
          %p380 = pneg %p161
        $region30: #{tpu_custom_call.1} parent=11 // pred_check_branch
          %382 = sbr.rel (%p380) target = $region32
        $region31: #{tpu_custom_call.1} parent=11 // pred_region
          %s384 = ssub.s32 768, 768
          %385 = vsyncadd [#allocation12], %s384
          %s386 = sshll.u32 [#allocation11], 4
          %s387 = int_to_ptr.vmem [resolvable:$true] %s386
          %392 = dma.hbm_to_vmem [thread:$0]  %s5, 768, %s387, [#allocation12], 128, 128, 8
        $region32: #{tpu_custom_call.1} parent=11 // pred_fallthru
          _
        // Predicated region
        $region33: #{tpu_custom_call.1} parent=11 // pred_check
          %p393 = pneg %p182
        $region34: #{tpu_custom_call.1} parent=11 // pred_check_branch
          %395 = sbr.rel (%p393) target = $region36
        $region35: #{tpu_custom_call.1} parent=11 // pred_region
          %s397 = ssub.s32 32, 32
          %398 = vsyncadd [#allocation12], %s397
          %s400 = sshll.u32 [#allocation13], 4
          %s401 = int_to_ptr.vmem [resolvable:$true] %s400
          %403 = dma.hbm_to_vmem [thread:$0]  %s6, 32, %s401, [#allocation12]
        $region36: #{tpu_custom_call.1} parent=11 // pred_fallthru
          _
        // Predicated region
        $region37: #{tpu_custom_call.1} parent=11 // pred_check
          %p404 = pneg %p203
        $region38: #{tpu_custom_call.1} parent=11 // pred_check_branch
          %406 = sbr.rel (%p404) target = $region40
        $region39: #{tpu_custom_call.1} parent=11 // pred_region
          %s408 = ssub.s32 32, 32
          %409 = vsyncadd [#allocation15], %s408
          %s411 = sshll.u32 [#allocation14], 4
          %s412 = int_to_ptr.vmem [resolvable:$true] %s411
          %414 = dma.hbm_to_vmem [thread:$0]  %s7, 32, %s412, [#allocation15]
        $region40: #{tpu_custom_call.1} parent=11 // pred_fallthru
          _
        // Predicated region
        $region41: #{tpu_custom_call.1} parent=11 // pred_check
          %p415 = pneg %p224
        $region42: #{tpu_custom_call.1} parent=11 // pred_check_branch
          %417 = sbr.rel (%p415) target = $region44
        $region43: #{tpu_custom_call.1} parent=11 // pred_region
          %s419 = ssub.s32 768, 768
          %420 = vsyncadd [#allocation15], %s419
          %s421 = sshll.u32 [#allocation16], 4
          %s422 = int_to_ptr.vmem [resolvable:$true] %s421
          %427 = dma.hbm_to_vmem [thread:$0]  %s8, 768, %s422, [#allocation15], 128, 128, 8
        $region44: #{tpu_custom_call.1} parent=11 // pred_fallthru
          _
        // Predicated region
        $region45: #{tpu_custom_call.1} parent=11 // pred_check
          %p428 = pneg %p245
        $region46: #{tpu_custom_call.1} parent=11 // pred_check_branch
          %430 = sbr.rel (%p428) target = $region48
        $region47: #{tpu_custom_call.1} parent=11 // pred_region
          %s432 = ssub.s32 768, 768
          %433 = vsyncadd [#allocation18], %s432
          %s434 = sshll.u32 [#allocation17], 4
          %s435 = int_to_ptr.vmem [resolvable:$true] %s434
          %440 = dma.hbm_to_vmem [thread:$0]  %s9, 768, %s435, [#allocation18], 128, 128, 8
        $region48: #{tpu_custom_call.1} parent=11 // pred_fallthru
          _
        // Predicated region
        $region49: #{tpu_custom_call.1} parent=11 // pred_check
          %p441 = pneg %p266
        $region50: #{tpu_custom_call.1} parent=11 // pred_check_branch
          %443 = sbr.rel (%p441) target = $region52
        $region51: #{tpu_custom_call.1} parent=11 // pred_region
          %s445 = ssub.s32 64, 64
          %446 = vsyncadd [#allocation18], %s445
          %s448 = sshll.u32 [#allocation19], 4
          %s449 = int_to_ptr.vmem [resolvable:$true] %s448
          %451 = dma.hbm_to_vmem [thread:$0]  %s10, 64, %s449, [#allocation18]
        $region52: #{tpu_custom_call.1} parent=11 // pred_fallthru
          _
        // Predicated region
        $region53: #{tpu_custom_call.1} parent=11 // pred_check
          %p452 = pneg %p287
        $region54: #{tpu_custom_call.1} parent=11 // pred_check_branch
          %454 = sbr.rel (%p452) target = $region56
        $region55: #{tpu_custom_call.1} parent=11 // pred_region
          %s456 = ssub.s32 128, 128
          %457 = vsyncadd [#allocation21], %s456
          %s459 = sshll.u32 [#allocation20], 4
          %s460 = int_to_ptr.vmem [resolvable:$true] %s459
          %462 = dma.hbm_to_vmem [thread:$0]  %s11, 128, %s460, [#allocation21]
        $region56: #{tpu_custom_call.1} parent=11 // pred_fallthru
          _
      $region12: #{tpu_custom_call.1} parent=5 // pred_fallthru
        _
      %p463 = scmp.lt.s32.totalorder %s30, 2
      // Predicated region
      $region57: #{tpu_custom_call.1} parent=5 // pred_check
        %p464 = pneg %p463
      $region58: #{tpu_custom_call.1} parent=5 // pred_check_branch
        %466 = sbr.rel (%p464) target = $region60
      $region59: #{tpu_custom_call.1} parent=5 // pred_region
        // Predicated region
        $region61: #{tpu_custom_call.1} parent=59 // pred_check
          %p467 = pneg %p50
        $region62: #{tpu_custom_call.1} parent=59 // pred_check_branch
          %469 = sbr.rel (%p467) target = $region64
        $region63: #{tpu_custom_call.1} parent=59 // pred_region
          %s470 = sand.u32 %s40, 1
          %s471 = scalar_lea.sflag [#allocation3], %s470
          %s472 = sand.u32 %s40, 1
          %s473 = smul.addr %s472, 16
          %s474 = scalar_lea.vmem [#allocation2], %s473
          %s476 = ssub.s32 256, 256
          %477 = vsyncadd %s471, %s476
          %s478 = smul.addr %s30, 2
          %s479 = smul.addr %s478, 128
          %s480 = scalar_lea.hbm %s0, %s479
          %s482 = sshll.u32 %s474, 4
          %s483 = int_to_ptr.vmem [resolvable:$true] %s482
          %485 = dma.hbm_to_vmem [thread:$0]  %s480, 256, %s483, %s471
        $region64: #{tpu_custom_call.1} parent=59 // pred_fallthru
          _
      $region60: #{tpu_custom_call.1} parent=5 // pred_fallthru
        _
      %p486 = scmp.le.s32.totalorder 1, %s30
      %p487 = scmp.lt.s32.totalorder %s30, 3
      %p488 = pnand %p486, %p487
      %p489 = pneg %p488
      // Predicated region
      $region65: #{tpu_custom_call.1} parent=5 // pred_check
        _
      $region66: #{tpu_custom_call.1} parent=5 // pred_check_branch
        %491 = sbr.rel (%p488) target = $region68
      $region67: #{tpu_custom_call.1} parent=5 // pred_region
        %s492 = ssub.s32 %s30, 1
        %s493 = sand.u32 %s43, 1
        %s494 = scalar_lea.sflag [#allocation3], %s493
        %s495 = sand.u32 %s43, 1
        %s496 = smul.addr %s495, 16
        %s497 = scalar_lea.vmem [#allocation2], %s496
        // Predicated region
        $region69: #{tpu_custom_call.1} parent=67 // pred_check
          %p498 = pneg %p56
        $region70: #{tpu_custom_call.1} parent=67 // pred_check_branch
          %500 = sbr.rel (%p498) target = $region72
        $region71: #{tpu_custom_call.1} parent=67 // pred_region
          %501 = dma.done %s494, 256
        $region72: #{tpu_custom_call.1} parent=67 // pred_fallthru
          _
        // Predicated region
        $region73: #{tpu_custom_call.1} parent=67 // pred_check
          %p502 = pneg %p77
        $region74: #{tpu_custom_call.1} parent=67 // pred_check_branch
          %504 = sbr.rel (%p502) target = $region76
        $region75: #{tpu_custom_call.1} parent=67 // pred_region
          %505 = dma.done [#allocation6], 384
        $region76: #{tpu_custom_call.1} parent=67 // pred_fallthru
          _
        // Predicated region
        $region77: #{tpu_custom_call.1} parent=67 // pred_check
          %p506 = pneg %p98
        $region78: #{tpu_custom_call.1} parent=67 // pred_check_branch
          %508 = sbr.rel (%p506) target = $region80
        $region79: #{tpu_custom_call.1} parent=67 // pred_region
          %509 = dma.done [#allocation6], 768
        $region80: #{tpu_custom_call.1} parent=67 // pred_fallthru
          _
        // Predicated region
        $region81: #{tpu_custom_call.1} parent=67 // pred_check
          %p510 = pneg %p119
        $region82: #{tpu_custom_call.1} parent=67 // pred_check_branch
          %512 = sbr.rel (%p510) target = $region84
        $region83: #{tpu_custom_call.1} parent=67 // pred_region
          %513 = dma.done [#allocation9], 768
        $region84: #{tpu_custom_call.1} parent=67 // pred_fallthru
          _
        // Predicated region
        $region85: #{tpu_custom_call.1} parent=67 // pred_check
          %p514 = pneg %p140
        $region86: #{tpu_custom_call.1} parent=67 // pred_check_branch
          %516 = sbr.rel (%p514) target = $region88
        $region87: #{tpu_custom_call.1} parent=67 // pred_region
          %517 = dma.done [#allocation9], 512
        $region88: #{tpu_custom_call.1} parent=67 // pred_fallthru
          _
        // Predicated region
        $region89: #{tpu_custom_call.1} parent=67 // pred_check
          %p518 = pneg %p161
        $region90: #{tpu_custom_call.1} parent=67 // pred_check_branch
          %520 = sbr.rel (%p518) target = $region92
        $region91: #{tpu_custom_call.1} parent=67 // pred_region
          %521 = dma.done [#allocation12], 768
        $region92: #{tpu_custom_call.1} parent=67 // pred_fallthru
          _
        // Predicated region
        $region93: #{tpu_custom_call.1} parent=67 // pred_check
          %p522 = pneg %p182
        $region94: #{tpu_custom_call.1} parent=67 // pred_check_branch
          %524 = sbr.rel (%p522) target = $region96
        $region95: #{tpu_custom_call.1} parent=67 // pred_region
          %525 = dma.done [#allocation12], 32
        $region96: #{tpu_custom_call.1} parent=67 // pred_fallthru
          _
        // Predicated region
        $region97: #{tpu_custom_call.1} parent=67 // pred_check
          %p526 = pneg %p203
        $region98: #{tpu_custom_call.1} parent=67 // pred_check_branch
          %528 = sbr.rel (%p526) target = $region100
        $region99: #{tpu_custom_call.1} parent=67 // pred_region
          %529 = dma.done [#allocation15], 32
        $region100: #{tpu_custom_call.1} parent=67 // pred_fallthru
          _
        // Predicated region
        $region101: #{tpu_custom_call.1} parent=67 // pred_check
          %p530 = pneg %p224
        $region102: #{tpu_custom_call.1} parent=67 // pred_check_branch
          %532 = sbr.rel (%p530) target = $region104
        $region103: #{tpu_custom_call.1} parent=67 // pred_region
          %533 = dma.done [#allocation15], 768
        $region104: #{tpu_custom_call.1} parent=67 // pred_fallthru
          _
        // Predicated region
        $region105: #{tpu_custom_call.1} parent=67 // pred_check
          %p534 = pneg %p245
        $region106: #{tpu_custom_call.1} parent=67 // pred_check_branch
          %536 = sbr.rel (%p534) target = $region108
        $region107: #{tpu_custom_call.1} parent=67 // pred_region
          %537 = dma.done [#allocation18], 768
        $region108: #{tpu_custom_call.1} parent=67 // pred_fallthru
          _
        // Predicated region
        $region109: #{tpu_custom_call.1} parent=67 // pred_check
          %p538 = pneg %p266
        $region110: #{tpu_custom_call.1} parent=67 // pred_check_branch
          %540 = sbr.rel (%p538) target = $region112
        $region111: #{tpu_custom_call.1} parent=67 // pred_region
          %541 = dma.done [#allocation18], 64
        $region112: #{tpu_custom_call.1} parent=67 // pred_fallthru
          _
        // Predicated region
        $region113: #{tpu_custom_call.1} parent=67 // pred_check
          %p542 = pneg %p287
        $region114: #{tpu_custom_call.1} parent=67 // pred_check_branch
          %544 = sbr.rel (%p542) target = $region116
        $region115: #{tpu_custom_call.1} parent=67 // pred_region
          %545 = dma.done [#allocation21], 128
        $region116: #{tpu_custom_call.1} parent=67 // pred_fallthru
          _
        %s546 = sand.u32 %s43, 1
        %s547 = scalar_lea.sflag [#allocation3], %s546
        %s548 = sand.u32 %s43, 1
        %s549 = smul.addr %s548, 16
        %s550 = scalar_lea.vmem [#allocation2], %s549
        %p551 = pneg %p56
        %p552 = pneg %p53
        %p553 = pneg %p77
        %p554 = pneg %p74
        %p555 = pneg %p98
        %p556 = pneg %p95
        %p557 = pneg %p119
        %p558 = pneg %p116
        %p559 = pneg %p140
        %p560 = pneg %p137
        %p561 = pneg %p161
        %p562 = pneg %p158
        %p563 = pneg %p182
        %p564 = pneg %p179
        %p565 = pneg %p203
        %p566 = pneg %p200
        %p567 = pneg %p224
        %p568 = pneg %p221
        %p569 = pneg %p245
        %p570 = pneg %p242
        %p571 = pneg %p266
        %p572 = pneg %p263
        %p573 = pneg %p287
        %p574 = pneg %p284
        %p575 = pneg %p313
        %p576 = pneg %p310
        %s577 = sand.u32 %s300, 1
        %s578 = scalar_lea.sflag [#allocation4], %s577
        %s579 = sand.u32 %s300, 1
        %s580 = smul.addr %s579, 16
        %s581 = scalar_lea.vmem [#allocation22], %s580
        %v583 = vld [vmem:[%s497] sm:$0xff]
        %v584 = vld [vmem:[%s497 + $0x8] sm:$0xff]
        %v585 = vld [vmem:[#allocation5] sm:$0xf]
        %v586 = vld [vmem:[#allocation5 + $0x4] sm:$0xf]
        %v587 = vld [vmem:[#allocation5 + $0x8] sm:$0xf]
        %v588 = vld [vmem:[#allocation5 + $0xc] sm:$0xf]
        %v589 = vld [vmem:[#allocation5 + $0x10] sm:$0xf]
        %v590 = vld [vmem:[#allocation5 + $0x14] sm:$0xf]
        %v591 = vpack.c.bf16 %v583, %v583
        %v592 = vpack.c.bf16 %v584, %v584
        %v593 = vld [vmem:[#allocation7] sm:$0xff]
        %v594 = vld [vmem:[#allocation7 + $0x8] sm:$0xff]
        %v595 = vld [vmem:[#allocation7 + $0x10] sm:$0xff]
        %v596 = vld [vmem:[#allocation7 + $0x18] sm:$0xff]
        %v597 = vld [vmem:[#allocation7 + $0x20] sm:$0xff]
        %v598 = vld [vmem:[#allocation7 + $0x28] sm:$0xff]
        %600 = vset.pattern.permute.xlu0 0
        %601 = vperm.xlu0 %600, %v593
        %v602 = vpop.permute.xlu0 %601
        %605 = vset.pattern.permute.xlu0 0
        %606 = vperm.xlu0 %605, %v594
        %v607 = vpop.permute.xlu0 %606
        %610 = vset.pattern.permute.xlu0 0
        %611 = vperm.xlu0 %610, %v595
        %v612 = vpop.permute.xlu0 %611
        %615 = vset.pattern.permute.xlu0 0
        %616 = vperm.xlu0 %615, %v596
        %v617 = vpop.permute.xlu0 %616
        %620 = vset.pattern.permute.xlu0 0
        %621 = vperm.xlu0 %620, %v597
        %v622 = vpop.permute.xlu0 %621
        %625 = vset.pattern.permute.xlu0 0
        %626 = vperm.xlu0 %625, %v598
        %v627 = vpop.permute.xlu0 %626
        %v635 = vunpack.c.l.b16 %v585
        %v636 = vunpack.c.l.b16 %v586
        %v637 = vunpack.c.l.b16 %v587
        %v638 = vunpack.c.l.b16 %v588
        %v639 = vunpack.c.l.b16 %v589
        %v640 = vunpack.c.l.b16 %v590
        %v641 = vpack.c.b16 %v636, %v635
        %v642 = vpack.c.b16 %v638, %v637
        %v643 = vpack.c.b16 %v640, %v639
        %vm644 = vcmask 64512
        %v646 = vsel %vm644, %v641, 0
        %v649 = vsel %vm644, %v642, 0
        %v652 = vsel %vm644, %v643, 0
        %vm654 = vcmask 1043456
        %v656 = vsel %vm654, %v591, 0
        %v659 = vsel %vm654, %v592, 0
        %661 = vmatprep.subr.bf16.mxu0 %v659
        %662 = vmatpush1.bf16.msra.mxu0 %v656
        %663 = vmatprep.subr.bf16.mxu0 0
        %664 = vmatpush1.bf16.msra.mxu0 0
        %665 = vmatprep.subr.bf16.mxu0 0
        %666 = vmatpush1.bf16.msra.mxu0 0
        %667 = vmatprep.subr.bf16.mxu0 0
        %668 = vmatpush1.bf16.msra.mxu0 0
        %669 = vmatprep.subr.bf16.mxu0 0
        %670 = vmatpush1.bf16.msra.mxu0 0
        %671 = vmatprep.subr.bf16.mxu0 0
        %672 = vmatpush1.bf16.msra.mxu0 0
        %673 = vmatprep.subr.bf16.mxu0 0
        %674 = vmatpush1.bf16.msra.mxu0 0
        %675 = vmatprep.subr.bf16.mxu0 0
        %676 = vmatpush1.bf16.msra.mxu0 0
        %677 = vmatprep.subr.bf16.mxu0 0
        %678 = vmatpush1.bf16.msra.mxu0 0
        %679 = vmatprep.subr.bf16.mxu0 0
        %680 = vmatpush1.bf16.msra.mxu0 0
        %681 = vmatprep.subr.bf16.mxu0 0
        %682 = vmatpush1.bf16.msra.mxu0 0
        %683 = vmatprep.subr.bf16.mxu0 0
        %684 = vmatpush1.bf16.msra.mxu0 0
        %685 = vmatprep.subr.bf16.mxu0 0
        %686 = vmatpush1.bf16.msra.mxu0 0
        %687 = vmatprep.subr.bf16.mxu0 0
        %688 = vmatpush1.bf16.msra.mxu0 0
        %689 = vmatprep.subr.bf16.mxu0 0
        %690 = vmatpush1.bf16.msra.mxu0 0
        %691 = vmatprep.subr.bf16.mxu0 0
        %692 = vmatpush1.bf16.msra.mxu0 0
        %693 = vmatprep.mubr.bf16.mxu0 0
        %694 = vmatmul.mubr.bf16.gmra.mrb[0].mxu0 %v646
        %v695 = vpop.f32.mrb[0].mxu0
        %v696 = vadd.f32 %v602, %v695
        %v697 = vpop.f32.mrb[0].mxu0
        %v698 = vadd.f32 %v602, %v697
        %v699 = vpop.f32.mrb[0].mxu0
        %v700 = vadd.f32 %v607, %v699
        %v701 = vpop.f32.mrb[0].mxu0
        %v702 = vadd.f32 %v607, %v701
        %703 = vmatprep.mubr.bf16.mxu0 0
        %704 = vmatmul.mubr.bf16.gmra.mrb[0].mxu0 %v649
        %v705 = vpop.f32.mrb[0].mxu0
        %v706 = vadd.f32 %v612, %v705
        %v707 = vpop.f32.mrb[0].mxu0
        %v708 = vadd.f32 %v612, %v707
        %v709 = vpop.f32.mrb[0].mxu0
        %v710 = vadd.f32 %v617, %v709
        %v711 = vpop.f32.mrb[0].mxu0
        %v712 = vadd.f32 %v617, %v711
        %713 = vmatprep.mubr.bf16.mxu0 0
        %714 = vmatmul.mubr.bf16.gmra.mrb[0].mxu0 %v652
        %v715 = vpop.f32.mrb[0].mxu0
        %v716 = vadd.f32 %v622, %v715
        %v717 = vpop.f32.mrb[0].mxu0
        %v718 = vadd.f32 %v622, %v717
        %v719 = vpop.f32.mrb[0].mxu0
        %v720 = vadd.f32 %v627, %v719
        %v721 = vpop.f32.mrb[0].mxu0
        %v722 = vadd.f32 %v627, %v721
        %723 = vdwg.mxu0
        %v724 = vxor.u32 %v696, 2147483648
        %v725 = vxor.u32 %v698, 2147483648
        %v726 = vxor.u32 %v700, 2147483648
        %v727 = vxor.u32 %v702, 2147483648
        %v728 = vxor.u32 %v706, 2147483648
        %v729 = vxor.u32 %v708, 2147483648
        %v730 = vxor.u32 %v710, 2147483648
        %v731 = vxor.u32 %v712, 2147483648
        %v732 = vxor.u32 %v716, 2147483648
        %v733 = vxor.u32 %v718, 2147483648
        %v734 = vxor.u32 %v720, 2147483648
        %v735 = vxor.u32 %v722, 2147483648
        %v736 = vmul.f32 %v724, 1.442695
        %v737 = vpow.pop %v736
        %v738 = vmul.f32 %v725, 1.442695
        %v739 = vpow.pop %v738
        %v740 = vmul.f32 %v726, 1.442695
        %v741 = vpow.pop %v740
        %v742 = vmul.f32 %v727, 1.442695
        %v743 = vpow.pop %v742
        %v744 = vmul.f32 %v728, 1.442695
        %v745 = vpow.pop %v744
        %v746 = vmul.f32 %v729, 1.442695
        %v747 = vpow.pop %v746
        %v748 = vmul.f32 %v730, 1.442695
        %v749 = vpow.pop %v748
        %v750 = vmul.f32 %v731, 1.442695
        %v751 = vpow.pop %v750
        %v752 = vmul.f32 %v732, 1.442695
        %v753 = vpow.pop %v752
        %v754 = vmul.f32 %v733, 1.442695
        %v755 = vpow.pop %v754
        %v756 = vmul.f32 %v734, 1.442695
        %v757 = vpow.pop %v756
        %v758 = vmul.f32 %v735, 1.442695
        %v759 = vpow.pop %v758
        %v760 = vadd.f32 %v737, 1.0
        %v761 = vadd.f32 %v739, 1.0
        %v762 = vadd.f32 %v741, 1.0
        %v763 = vadd.f32 %v743, 1.0
        %v764 = vadd.f32 %v745, 1.0
        %v765 = vadd.f32 %v747, 1.0
        %v766 = vadd.f32 %v749, 1.0
        %v767 = vadd.f32 %v751, 1.0
        %v768 = vadd.f32 %v753, 1.0
        %v769 = vadd.f32 %v755, 1.0
        %v770 = vadd.f32 %v757, 1.0
        %v771 = vadd.f32 %v759, 1.0
        %v772 = vrcp.pop %v760
        %v773 = vmul.f32 1.0, %v772
        %v774 = vrcp.pop %v761
        %v775 = vmul.f32 1.0, %v774
        %v776 = vrcp.pop %v762
        %v777 = vmul.f32 1.0, %v776
        %v778 = vrcp.pop %v763
        %v779 = vmul.f32 1.0, %v778
        %v780 = vrcp.pop %v764
        %v781 = vmul.f32 1.0, %v780
        %v782 = vrcp.pop %v765
        %v783 = vmul.f32 1.0, %v782
        %v784 = vrcp.pop %v766
        %v785 = vmul.f32 1.0, %v784
        %v786 = vrcp.pop %v767
        %v787 = vmul.f32 1.0, %v786
        %v788 = vrcp.pop %v768
        %v789 = vmul.f32 1.0, %v788
        %v790 = vrcp.pop %v769
        %v791 = vmul.f32 1.0, %v790
        %v792 = vrcp.pop %v770
        %v793 = vmul.f32 1.0, %v792
        %v794 = vrcp.pop %v771
        %v795 = vmul.f32 1.0, %v794
        %v796 = vmul.f32 %v696, %v773
        %v797 = vmul.f32 %v698, %v775
        %v798 = vmul.f32 %v700, %v777
        %v799 = vmul.f32 %v702, %v779
        %v800 = vmul.f32 %v706, %v781
        %v801 = vmul.f32 %v708, %v783
        %v802 = vmul.f32 %v710, %v785
        %v803 = vmul.f32 %v712, %v787
        %v804 = vmul.f32 %v716, %v789
        %v805 = vmul.f32 %v718, %v791
        %v806 = vmul.f32 %v720, %v793
        %v807 = vmul.f32 %v722, %v795
        %v808 = vld [vmem:[#allocation8] sm:$0xff]
        %v809 = vld [vmem:[#allocation8 + $0x8] sm:$0xff]
        %v810 = vld [vmem:[#allocation8 + $0x10] sm:$0xff]
        %v811 = vld [vmem:[#allocation8 + $0x18] sm:$0xff]
        %v812 = vld [vmem:[#allocation8 + $0x20] sm:$0xff]
        %v813 = vld [vmem:[#allocation8 + $0x28] sm:$0xff]
        %v814 = vld [vmem:[#allocation10] sm:$0xff]
        %v815 = vld [vmem:[#allocation10 + $0x8] sm:$0xff]
        %v816 = vld [vmem:[#allocation10 + $0x10] sm:$0x1]
        %v817 = vld [vmem:[#allocation10 + $0x18] sm:$0x1]
        %818 = vrot.lane.b32.xlu0 %v796, 17
        %v819 = vpop.permute.xlu0 %818
        %820 = vrot.lane.b32.xlu0 %v798, 17
        %v821 = vpop.permute.xlu0 %820
        %822 = vrot.lane.b32.xlu0 %v800, 17
        %v823 = vpop.permute.xlu0 %822
        %824 = vrot.lane.b32.xlu0 %v802, 17
        %v825 = vpop.permute.xlu0 %824
        %826 = vrot.lane.b32.xlu0 %v804, 17
        %v827 = vpop.permute.xlu0 %826
        %828 = vrot.lane.b32.xlu0 %v806, 17
        %v829 = vpop.permute.xlu0 %828
        %830 = vrot.lane.b32.xlu0 %v797, 17
        %v831 = vpop.permute.xlu0 %830
        %832 = vrot.lane.b32.xlu0 %v799, 17
        %v833 = vpop.permute.xlu0 %832
        %834 = vrot.lane.b32.xlu0 %v801, 17
        %v835 = vpop.permute.xlu0 %834
        %836 = vrot.lane.b32.xlu0 %v803, 17
        %v837 = vpop.permute.xlu0 %836
        %838 = vrot.lane.b32.xlu0 %v805, 17
        %v839 = vpop.permute.xlu0 %838
        %840 = vrot.lane.b32.xlu0 %v807, 17
        %v841 = vpop.permute.xlu0 %840
        %v842 = vlaneseq
        %v843 = vand.u32 %v842, 127
        %vm844 = vcmp.lt.s32.totalorder %v843, 17
        %v845 = vsel %vm844, %v819, %v831
        %v846 = vsel %vm844, %v821, %v833
        %v847 = vsel %vm844, %v823, %v835
        %v848 = vsel %vm844, %v825, %v837
        %v849 = vsel %vm844, %v827, %v839
        %v850 = vsel %vm844, %v829, %v841
        %v851 = vsel %vm844, %v831, %v819
        %v852 = vsel %vm844, %v833, %v821
        %v853 = vsel %vm844, %v835, %v823
        %v854 = vsel %vm844, %v837, %v825
        %v855 = vsel %vm844, %v839, %v827
        %v856 = vsel %vm844, %v841, %v829
        %858 = vset.pattern.permute.xlu0 0
        %859 = vperm.xlu0 %858, %v808
        %v860 = vpop.permute.xlu0 %859
        %863 = vset.pattern.permute.xlu0 0
        %864 = vperm.xlu0 %863, %v809
        %v865 = vpop.permute.xlu0 %864
        %868 = vset.pattern.permute.xlu0 0
        %869 = vperm.xlu0 %868, %v810
        %v870 = vpop.permute.xlu0 %869
        %873 = vset.pattern.permute.xlu0 0
        %874 = vperm.xlu0 %873, %v811
        %v875 = vpop.permute.xlu0 %874
        %878 = vset.pattern.permute.xlu0 0
        %879 = vperm.xlu0 %878, %v812
        %v880 = vpop.permute.xlu0 %879
        %883 = vset.pattern.permute.xlu0 0
        %884 = vperm.xlu0 %883, %v813
        %v885 = vpop.permute.xlu0 %884
        %v887 = vmul.f32 %v851, %v860
        %v888 = vmul.f32 %v845, %v860
        %v889 = vmul.f32 %v852, %v865
        %v890 = vmul.f32 %v846, %v865
        %v891 = vmul.f32 %v853, %v870
        %v892 = vmul.f32 %v847, %v870
        %v893 = vmul.f32 %v854, %v875
        %v894 = vmul.f32 %v848, %v875
        %v895 = vmul.f32 %v855, %v880
        %v896 = vmul.f32 %v849, %v880
        %v897 = vmul.f32 %v856, %v885
        %v898 = vmul.f32 %v850, %v885
        %v899 = vlaneseq
        %v900 = vshrl.u32 %v899, 7
        %v901 = vsub.s32 0, %v900
        %v902 = vrot.slane %v814, %v901
        %v903 = vlaneseq
        %v904 = vshrl.u32 %v903, 7
        %v905 = vsub.s32 0, %v904
        %v906 = vrot.slane %v815, %v905
        %v907 = vmul.f32 %v887, %v902
        %v908 = vmul.f32 %v888, %v906
        %v909 = vmul.f32 %v889, %v902
        %v910 = vmul.f32 %v890, %v906
        %v911 = vmul.f32 %v891, %v902
        %v912 = vmul.f32 %v892, %v906
        %v913 = vmul.f32 %v893, %v902
        %v914 = vmul.f32 %v894, %v906
        %v915 = vmul.f32 %v895, %v902
        %v916 = vmul.f32 %v896, %v906
        %v917 = vmul.f32 %v897, %v902
        %v918 = vmul.f32 %v898, %v906
        %919 = vrot.lane.b32.xlu0 %v796, 16
        %v920 = vpop.permute.xlu0 %919
        %921 = vrot.lane.b32.xlu0 %v798, 16
        %v922 = vpop.permute.xlu0 %921
        %923 = vrot.lane.b32.xlu0 %v800, 16
        %v924 = vpop.permute.xlu0 %923
        %925 = vrot.lane.b32.xlu0 %v802, 16
        %v926 = vpop.permute.xlu0 %925
        %927 = vrot.lane.b32.xlu0 %v804, 16
        %v928 = vpop.permute.xlu0 %927
        %929 = vrot.lane.b32.xlu0 %v806, 16
        %v930 = vpop.permute.xlu0 %929
        %931 = vrot.lane.b32.xlu0 %v797, 16
        %v932 = vpop.permute.xlu0 %931
        %933 = vrot.lane.b32.xlu0 %v799, 16
        %v934 = vpop.permute.xlu0 %933
        %935 = vrot.lane.b32.xlu0 %v801, 16
        %v936 = vpop.permute.xlu0 %935
        %937 = vrot.lane.b32.xlu0 %v803, 16
        %v938 = vpop.permute.xlu0 %937
        %939 = vrot.lane.b32.xlu0 %v805, 16
        %v940 = vpop.permute.xlu0 %939
        %941 = vrot.lane.b32.xlu0 %v807, 16
        %v942 = vpop.permute.xlu0 %941
        %vm943 = vcmp.lt.s32.totalorder %v843, 16
        %v944 = vsel %vm943, %v920, %v932
        %v945 = vsel %vm943, %v922, %v934
        %v946 = vsel %vm943, %v924, %v936
        %v947 = vsel %vm943, %v926, %v938
        %v948 = vsel %vm943, %v928, %v940
        %v949 = vsel %vm943, %v930, %v942
        %v950 = vsel %vm943, %v932, %v920
        %v951 = vsel %vm943, %v934, %v922
        %v952 = vsel %vm943, %v936, %v924
        %v953 = vsel %vm943, %v938, %v926
        %v954 = vsel %vm943, %v940, %v928
        %v955 = vsel %vm943, %v942, %v930
        %956 = vset.pattern.permute.xlu0 1
        %957 = vperm.xlu0 %956, %v808
        %v958 = vpop.permute.xlu0 %957
        %960 = vset.pattern.permute.xlu0 1
        %961 = vperm.xlu0 %960, %v809
        %v962 = vpop.permute.xlu0 %961
        %964 = vset.pattern.permute.xlu0 1
        %965 = vperm.xlu0 %964, %v810
        %v966 = vpop.permute.xlu0 %965
        %968 = vset.pattern.permute.xlu0 1
        %969 = vperm.xlu0 %968, %v811
        %v970 = vpop.permute.xlu0 %969
        %972 = vset.pattern.permute.xlu0 1
        %973 = vperm.xlu0 %972, %v812
        %v974 = vpop.permute.xlu0 %973
        %976 = vset.pattern.permute.xlu0 1
        %977 = vperm.xlu0 %976, %v813
        %v978 = vpop.permute.xlu0 %977
        %v980 = vmul.f32 %v950, %v958
        %v981 = vmul.f32 %v944, %v958
        %v982 = vmul.f32 %v951, %v962
        %v983 = vmul.f32 %v945, %v962
        %v984 = vmul.f32 %v952, %v966
        %v985 = vmul.f32 %v946, %v966
        %v986 = vmul.f32 %v953, %v970
        %v987 = vmul.f32 %v947, %v970
        %v988 = vmul.f32 %v954, %v974
        %v989 = vmul.f32 %v948, %v974
        %v990 = vmul.f32 %v955, %v978
        %v991 = vmul.f32 %v949, %v978
        %v992 = vlaneseq
        %v993 = vshrl.u32 %v992, 7
        %v994 = vsub.s32 1, %v993
        %v995 = vrot.slane %v814, %v994
        %v996 = vlaneseq
        %v997 = vshrl.u32 %v996, 7
        %v998 = vsub.s32 1, %v997
        %v999 = vrot.slane %v815, %v998
        %v1000 = vmul.f32 %v980, %v995
        %v1001 = vmul.f32 %v981, %v999
        %v1002 = vmul.f32 %v982, %v995
        %v1003 = vmul.f32 %v983, %v999
        %v1004 = vmul.f32 %v984, %v995
        %v1005 = vmul.f32 %v985, %v999
        %v1006 = vmul.f32 %v986, %v995
        %v1007 = vmul.f32 %v987, %v999
        %v1008 = vmul.f32 %v988, %v995
        %v1009 = vmul.f32 %v989, %v999
        %v1010 = vmul.f32 %v990, %v995
        %v1011 = vmul.f32 %v991, %v999
        %v1012 = vadd.f32 %v907, %v1000
        %v1013 = vadd.f32 %v908, %v1001
        %v1014 = vadd.f32 %v909, %v1002
        %v1015 = vadd.f32 %v910, %v1003
        %v1016 = vadd.f32 %v911, %v1004
        %v1017 = vadd.f32 %v912, %v1005
        %v1018 = vadd.f32 %v913, %v1006
        %v1019 = vadd.f32 %v914, %v1007
        %v1020 = vadd.f32 %v915, %v1008
        %v1021 = vadd.f32 %v916, %v1009
        %v1022 = vadd.f32 %v917, %v1010
        %v1023 = vadd.f32 %v918, %v1011
        %1024 = vrot.lane.b32.xlu0 %v796, 15
        %v1025 = vpop.permute.xlu0 %1024
        %1026 = vrot.lane.b32.xlu0 %v798, 15
        %v1027 = vpop.permute.xlu0 %1026
        %1028 = vrot.lane.b32.xlu0 %v800, 15
        %v1029 = vpop.permute.xlu0 %1028
        %1030 = vrot.lane.b32.xlu0 %v802, 15
        %v1031 = vpop.permute.xlu0 %1030
        %1032 = vrot.lane.b32.xlu0 %v804, 15
        %v1033 = vpop.permute.xlu0 %1032
        %1034 = vrot.lane.b32.xlu0 %v806, 15
        %v1035 = vpop.permute.xlu0 %1034
        %1036 = vrot.lane.b32.xlu0 %v797, 15
        %v1037 = vpop.permute.xlu0 %1036
        %1038 = vrot.lane.b32.xlu0 %v799, 15
        %v1039 = vpop.permute.xlu0 %1038
        %1040 = vrot.lane.b32.xlu0 %v801, 15
        %v1041 = vpop.permute.xlu0 %1040
        %1042 = vrot.lane.b32.xlu0 %v803, 15
        %v1043 = vpop.permute.xlu0 %1042
        %1044 = vrot.lane.b32.xlu0 %v805, 15
        %v1045 = vpop.permute.xlu0 %1044
        %1046 = vrot.lane.b32.xlu0 %v807, 15
        %v1047 = vpop.permute.xlu0 %1046
        %vm1048 = vcmp.lt.s32.totalorder %v843, 15
        %v1049 = vsel %vm1048, %v1025, %v1037
        %v1050 = vsel %vm1048, %v1027, %v1039
        %v1051 = vsel %vm1048, %v1029, %v1041
        %v1052 = vsel %vm1048, %v1031, %v1043
        %v1053 = vsel %vm1048, %v1033, %v1045
        %v1054 = vsel %vm1048, %v1035, %v1047
        %v1055 = vsel %vm1048, %v1037, %v1025
        %v1056 = vsel %vm1048, %v1039, %v1027
        %v1057 = vsel %vm1048, %v1041, %v1029
        %v1058 = vsel %vm1048, %v1043, %v1031
        %v1059 = vsel %vm1048, %v1045, %v1033
        %v1060 = vsel %vm1048, %v1047, %v1035
        %1061 = vset.pattern.permute.xlu0 2
        %1062 = vperm.xlu0 %1061, %v808
        %v1063 = vpop.permute.xlu0 %1062
        %1065 = vset.pattern.permute.xlu0 2
        %1066 = vperm.xlu0 %1065, %v809
        %v1067 = vpop.permute.xlu0 %1066
        %1069 = vset.pattern.permute.xlu0 2
        %1070 = vperm.xlu0 %1069, %v810
        %v1071 = vpop.permute.xlu0 %1070
        %1073 = vset.pattern.permute.xlu0 2
        %1074 = vperm.xlu0 %1073, %v811
        %v1075 = vpop.permute.xlu0 %1074
        %1077 = vset.pattern.permute.xlu0 2
        %1078 = vperm.xlu0 %1077, %v812
        %v1079 = vpop.permute.xlu0 %1078
        %1081 = vset.pattern.permute.xlu0 2
        %1082 = vperm.xlu0 %1081, %v813
        %v1083 = vpop.permute.xlu0 %1082
        %v1085 = vmul.f32 %v1055, %v1063
        %v1086 = vmul.f32 %v1049, %v1063
        %v1087 = vmul.f32 %v1056, %v1067
        %v1088 = vmul.f32 %v1050, %v1067
        %v1089 = vmul.f32 %v1057, %v1071
        %v1090 = vmul.f32 %v1051, %v1071
        %v1091 = vmul.f32 %v1058, %v1075
        %v1092 = vmul.f32 %v1052, %v1075
        %v1093 = vmul.f32 %v1059, %v1079
        %v1094 = vmul.f32 %v1053, %v1079
        %v1095 = vmul.f32 %v1060, %v1083
        %v1096 = vmul.f32 %v1054, %v1083
        %v1097 = vlaneseq
        %v1098 = vshrl.u32 %v1097, 7
        %v1099 = vsub.s32 2, %v1098
        %v1100 = vrot.slane %v814, %v1099
        %v1101 = vlaneseq
        %v1102 = vshrl.u32 %v1101, 7
        %v1103 = vsub.s32 2, %v1102
        %v1104 = vrot.slane %v815, %v1103
        %v1105 = vmul.f32 %v1085, %v1100
        %v1106 = vmul.f32 %v1086, %v1104
        %v1107 = vmul.f32 %v1087, %v1100
        %v1108 = vmul.f32 %v1088, %v1104
        %v1109 = vmul.f32 %v1089, %v1100
        %v1110 = vmul.f32 %v1090, %v1104
        %v1111 = vmul.f32 %v1091, %v1100
        %v1112 = vmul.f32 %v1092, %v1104
        %v1113 = vmul.f32 %v1093, %v1100
        %v1114 = vmul.f32 %v1094, %v1104
        %v1115 = vmul.f32 %v1095, %v1100
        %v1116 = vmul.f32 %v1096, %v1104
        %v1117 = vadd.f32 %v1012, %v1105
        %v1118 = vadd.f32 %v1013, %v1106
        %v1119 = vadd.f32 %v1014, %v1107
        %v1120 = vadd.f32 %v1015, %v1108
        %v1121 = vadd.f32 %v1016, %v1109
        %v1122 = vadd.f32 %v1017, %v1110
        %v1123 = vadd.f32 %v1018, %v1111
        %v1124 = vadd.f32 %v1019, %v1112
        %v1125 = vadd.f32 %v1020, %v1113
        %v1126 = vadd.f32 %v1021, %v1114
        %v1127 = vadd.f32 %v1022, %v1115
        %v1128 = vadd.f32 %v1023, %v1116
        %1129 = vrot.lane.b32.xlu0 %v796, 1
        %v1130 = vpop.permute.xlu0 %1129
        %1131 = vrot.lane.b32.xlu0 %v798, 1
        %v1132 = vpop.permute.xlu0 %1131
        %1133 = vrot.lane.b32.xlu0 %v800, 1
        %v1134 = vpop.permute.xlu0 %1133
        %1135 = vrot.lane.b32.xlu0 %v802, 1
        %v1136 = vpop.permute.xlu0 %1135
        %1137 = vrot.lane.b32.xlu0 %v804, 1
        %v1138 = vpop.permute.xlu0 %1137
        %1139 = vrot.lane.b32.xlu0 %v806, 1
        %v1140 = vpop.permute.xlu0 %1139
        %1141 = vrot.lane.b32.xlu0 %v797, 1
        %v1142 = vpop.permute.xlu0 %1141
        %1143 = vrot.lane.b32.xlu0 %v799, 1
        %v1144 = vpop.permute.xlu0 %1143
        %1145 = vrot.lane.b32.xlu0 %v801, 1
        %v1146 = vpop.permute.xlu0 %1145
        %1147 = vrot.lane.b32.xlu0 %v803, 1
        %v1148 = vpop.permute.xlu0 %1147
        %1149 = vrot.lane.b32.xlu0 %v805, 1
        %v1150 = vpop.permute.xlu0 %1149
        %1151 = vrot.lane.b32.xlu0 %v807, 1
        %v1152 = vpop.permute.xlu0 %1151
        %vm1153 = vcmp.lt.s32.totalorder %v843, 1
        %v1154 = vsel %vm1153, %v1130, %v1142
        %v1155 = vsel %vm1153, %v1132, %v1144
        %v1156 = vsel %vm1153, %v1134, %v1146
        %v1157 = vsel %vm1153, %v1136, %v1148
        %v1158 = vsel %vm1153, %v1138, %v1150
        %v1159 = vsel %vm1153, %v1140, %v1152
        %v1160 = vsel %vm1153, %v1142, %v1130
        %v1161 = vsel %vm1153, %v1144, %v1132
        %v1162 = vsel %vm1153, %v1146, %v1134
        %v1163 = vsel %vm1153, %v1148, %v1136
        %v1164 = vsel %vm1153, %v1150, %v1138
        %v1165 = vsel %vm1153, %v1152, %v1140
        %1166 = vset.pattern.permute.xlu0 3
        %1167 = vperm.xlu0 %1166, %v808
        %v1168 = vpop.permute.xlu0 %1167
        %1170 = vset.pattern.permute.xlu0 3
        %1171 = vperm.xlu0 %1170, %v809
        %v1172 = vpop.permute.xlu0 %1171
        %1174 = vset.pattern.permute.xlu0 3
        %1175 = vperm.xlu0 %1174, %v810
        %v1176 = vpop.permute.xlu0 %1175
        %1178 = vset.pattern.permute.xlu0 3
        %1179 = vperm.xlu0 %1178, %v811
        %v1180 = vpop.permute.xlu0 %1179
        %1182 = vset.pattern.permute.xlu0 3
        %1183 = vperm.xlu0 %1182, %v812
        %v1184 = vpop.permute.xlu0 %1183
        %1186 = vset.pattern.permute.xlu0 3
        %1187 = vperm.xlu0 %1186, %v813
        %v1188 = vpop.permute.xlu0 %1187
        %v1190 = vmul.f32 %v1160, %v1168
        %v1191 = vmul.f32 %v1154, %v1168
        %v1192 = vmul.f32 %v1161, %v1172
        %v1193 = vmul.f32 %v1155, %v1172
        %v1194 = vmul.f32 %v1162, %v1176
        %v1195 = vmul.f32 %v1156, %v1176
        %v1196 = vmul.f32 %v1163, %v1180
        %v1197 = vmul.f32 %v1157, %v1180
        %v1198 = vmul.f32 %v1164, %v1184
        %v1199 = vmul.f32 %v1158, %v1184
        %v1200 = vmul.f32 %v1165, %v1188
        %v1201 = vmul.f32 %v1159, %v1188
        %v1202 = vlaneseq
        %v1203 = vshrl.u32 %v1202, 7
        %v1204 = vsub.s32 3, %v1203
        %v1205 = vrot.slane %v814, %v1204
        %v1206 = vlaneseq
        %v1207 = vshrl.u32 %v1206, 7
        %v1208 = vsub.s32 3, %v1207
        %v1209 = vrot.slane %v815, %v1208
        %v1210 = vmul.f32 %v1190, %v1205
        %v1211 = vmul.f32 %v1191, %v1209
        %v1212 = vmul.f32 %v1192, %v1205
        %v1213 = vmul.f32 %v1193, %v1209
        %v1214 = vmul.f32 %v1194, %v1205
        %v1215 = vmul.f32 %v1195, %v1209
        %v1216 = vmul.f32 %v1196, %v1205
        %v1217 = vmul.f32 %v1197, %v1209
        %v1218 = vmul.f32 %v1198, %v1205
        %v1219 = vmul.f32 %v1199, %v1209
        %v1220 = vmul.f32 %v1200, %v1205
        %v1221 = vmul.f32 %v1201, %v1209
        %v1222 = vadd.f32 %v1117, %v1210
        %v1223 = vadd.f32 %v1118, %v1211
        %v1224 = vadd.f32 %v1119, %v1212
        %v1225 = vadd.f32 %v1120, %v1213
        %v1226 = vadd.f32 %v1121, %v1214
        %v1227 = vadd.f32 %v1122, %v1215
        %v1228 = vadd.f32 %v1123, %v1216
        %v1229 = vadd.f32 %v1124, %v1217
        %v1230 = vadd.f32 %v1125, %v1218
        %v1231 = vadd.f32 %v1126, %v1219
        %v1232 = vadd.f32 %v1127, %v1220
        %v1233 = vadd.f32 %v1128, %v1221
        %1234 = vset.pattern.permute.xlu0 4
        %1235 = vperm.xlu0 %1234, %v808
        %v1236 = vpop.permute.xlu0 %1235
        %1238 = vset.pattern.permute.xlu0 4
        %1239 = vperm.xlu0 %1238, %v809
        %v1240 = vpop.permute.xlu0 %1239
        %1242 = vset.pattern.permute.xlu0 4
        %1243 = vperm.xlu0 %1242, %v810
        %v1244 = vpop.permute.xlu0 %1243
        %1246 = vset.pattern.permute.xlu0 4
        %1247 = vperm.xlu0 %1246, %v811
        %v1248 = vpop.permute.xlu0 %1247
        %1250 = vset.pattern.permute.xlu0 4
        %1251 = vperm.xlu0 %1250, %v812
        %v1252 = vpop.permute.xlu0 %1251
        %1254 = vset.pattern.permute.xlu0 4
        %1255 = vperm.xlu0 %1254, %v813
        %v1256 = vpop.permute.xlu0 %1255
        %v1258 = vmul.f32 %v796, %v1236
        %v1259 = vmul.f32 %v797, %v1236
        %v1260 = vmul.f32 %v798, %v1240
        %v1261 = vmul.f32 %v799, %v1240
        %v1262 = vmul.f32 %v800, %v1244
        %v1263 = vmul.f32 %v801, %v1244
        %v1264 = vmul.f32 %v802, %v1248
        %v1265 = vmul.f32 %v803, %v1248
        %v1266 = vmul.f32 %v804, %v1252
        %v1267 = vmul.f32 %v805, %v1252
        %v1268 = vmul.f32 %v806, %v1256
        %v1269 = vmul.f32 %v807, %v1256
        %v1270 = vadd.f32 %v1222, %v1258
        %v1271 = vadd.f32 %v1223, %v1259
        %v1272 = vadd.f32 %v1224, %v1260
        %v1273 = vadd.f32 %v1225, %v1261
        %v1274 = vadd.f32 %v1226, %v1262
        %v1275 = vadd.f32 %v1227, %v1263
        %v1276 = vadd.f32 %v1228, %v1264
        %v1277 = vadd.f32 %v1229, %v1265
        %v1278 = vadd.f32 %v1230, %v1266
        %v1279 = vadd.f32 %v1231, %v1267
        %v1280 = vadd.f32 %v1232, %v1268
        %v1281 = vadd.f32 %v1233, %v1269
        %1282 = vrot.lane.b32.xlu0 %v796, 127
        %v1283 = vpop.permute.xlu0 %1282
        %1284 = vrot.lane.b32.xlu0 %v798, 127
        %v1285 = vpop.permute.xlu0 %1284
        %1286 = vrot.lane.b32.xlu0 %v800, 127
        %v1287 = vpop.permute.xlu0 %1286
        %1288 = vrot.lane.b32.xlu0 %v802, 127
        %v1289 = vpop.permute.xlu0 %1288
        %1290 = vrot.lane.b32.xlu0 %v804, 127
        %v1291 = vpop.permute.xlu0 %1290
        %1292 = vrot.lane.b32.xlu0 %v806, 127
        %v1293 = vpop.permute.xlu0 %1292
        %1294 = vrot.lane.b32.xlu0 %v797, 127
        %v1295 = vpop.permute.xlu0 %1294
        %1296 = vrot.lane.b32.xlu0 %v799, 127
        %v1297 = vpop.permute.xlu0 %1296
        %1298 = vrot.lane.b32.xlu0 %v801, 127
        %v1299 = vpop.permute.xlu0 %1298
        %1300 = vrot.lane.b32.xlu0 %v803, 127
        %v1301 = vpop.permute.xlu0 %1300
        %1302 = vrot.lane.b32.xlu0 %v805, 127
        %v1303 = vpop.permute.xlu0 %1302
        %1304 = vrot.lane.b32.xlu0 %v807, 127
        %v1305 = vpop.permute.xlu0 %1304
        %vm1306 = vcmp.lt.s32.totalorder %v843, 127
        %v1307 = vsel %vm1306, %v1283, %v1295
        %v1308 = vsel %vm1306, %v1285, %v1297
        %v1309 = vsel %vm1306, %v1287, %v1299
        %v1310 = vsel %vm1306, %v1289, %v1301
        %v1311 = vsel %vm1306, %v1291, %v1303
        %v1312 = vsel %vm1306, %v1293, %v1305
        %v1313 = vsel %vm1306, %v1295, %v1283
        %v1314 = vsel %vm1306, %v1297, %v1285
        %v1315 = vsel %vm1306, %v1299, %v1287
        %v1316 = vsel %vm1306, %v1301, %v1289
        %v1317 = vsel %vm1306, %v1303, %v1291
        %v1318 = vsel %vm1306, %v1305, %v1293
        %1319 = vset.pattern.permute.xlu0 5
        %1320 = vperm.xlu0 %1319, %v808
        %v1321 = vpop.permute.xlu0 %1320
        %1323 = vset.pattern.permute.xlu0 5
        %1324 = vperm.xlu0 %1323, %v809
        %v1325 = vpop.permute.xlu0 %1324
        %1327 = vset.pattern.permute.xlu0 5
        %1328 = vperm.xlu0 %1327, %v810
        %v1329 = vpop.permute.xlu0 %1328
        %1331 = vset.pattern.permute.xlu0 5
        %1332 = vperm.xlu0 %1331, %v811
        %v1333 = vpop.permute.xlu0 %1332
        %1335 = vset.pattern.permute.xlu0 5
        %1336 = vperm.xlu0 %1335, %v812
        %v1337 = vpop.permute.xlu0 %1336
        %1339 = vset.pattern.permute.xlu0 5
        %1340 = vperm.xlu0 %1339, %v813
        %v1341 = vpop.permute.xlu0 %1340
        %v1343 = vmul.f32 %v1307, %v1321
        %v1344 = vmul.f32 %v1313, %v1321
        %v1345 = vmul.f32 %v1308, %v1325
        %v1346 = vmul.f32 %v1314, %v1325
        %v1347 = vmul.f32 %v1309, %v1329
        %v1348 = vmul.f32 %v1315, %v1329
        %v1349 = vmul.f32 %v1310, %v1333
        %v1350 = vmul.f32 %v1316, %v1333
        %v1351 = vmul.f32 %v1311, %v1337
        %v1352 = vmul.f32 %v1317, %v1337
        %v1353 = vmul.f32 %v1312, %v1341
        %v1354 = vmul.f32 %v1318, %v1341
        %v1355 = vlaneseq
        %v1356 = vshrl.u32 %v1355, 7
        %v1357 = vsub.s32 5, %v1356
        %v1358 = vrot.slane %v814, %v1357
        %v1359 = vlaneseq
        %v1360 = vshrl.u32 %v1359, 7
        %v1361 = vsub.s32 5, %v1360
        %v1362 = vrot.slane %v815, %v1361
        %v1363 = vmul.f32 %v1343, %v1358
        %v1364 = vmul.f32 %v1344, %v1362
        %v1365 = vmul.f32 %v1345, %v1358
        %v1366 = vmul.f32 %v1346, %v1362
        %v1367 = vmul.f32 %v1347, %v1358
        %v1368 = vmul.f32 %v1348, %v1362
        %v1369 = vmul.f32 %v1349, %v1358
        %v1370 = vmul.f32 %v1350, %v1362
        %v1371 = vmul.f32 %v1351, %v1358
        %v1372 = vmul.f32 %v1352, %v1362
        %v1373 = vmul.f32 %v1353, %v1358
        %v1374 = vmul.f32 %v1354, %v1362
        %v1375 = vadd.f32 %v1270, %v1363
        %v1376 = vadd.f32 %v1271, %v1364
        %v1377 = vadd.f32 %v1272, %v1365
        %v1378 = vadd.f32 %v1273, %v1366
        %v1379 = vadd.f32 %v1274, %v1367
        %v1380 = vadd.f32 %v1275, %v1368
        %v1381 = vadd.f32 %v1276, %v1369
        %v1382 = vadd.f32 %v1277, %v1370
        %v1383 = vadd.f32 %v1278, %v1371
        %v1384 = vadd.f32 %v1279, %v1372
        %v1385 = vadd.f32 %v1280, %v1373
        %v1386 = vadd.f32 %v1281, %v1374
        %1387 = vrot.lane.b32.xlu0 %v796, 113
        %v1388 = vpop.permute.xlu0 %1387
        %1389 = vrot.lane.b32.xlu0 %v798, 113
        %v1390 = vpop.permute.xlu0 %1389
        %1391 = vrot.lane.b32.xlu0 %v800, 113
        %v1392 = vpop.permute.xlu0 %1391
        %1393 = vrot.lane.b32.xlu0 %v802, 113
        %v1394 = vpop.permute.xlu0 %1393
        %1395 = vrot.lane.b32.xlu0 %v804, 113
        %v1396 = vpop.permute.xlu0 %1395
        %1397 = vrot.lane.b32.xlu0 %v806, 113
        %v1398 = vpop.permute.xlu0 %1397
        %1399 = vrot.lane.b32.xlu0 %v797, 113
        %v1400 = vpop.permute.xlu0 %1399
        %1401 = vrot.lane.b32.xlu0 %v799, 113
        %v1402 = vpop.permute.xlu0 %1401
        %1403 = vrot.lane.b32.xlu0 %v801, 113
        %v1404 = vpop.permute.xlu0 %1403
        %1405 = vrot.lane.b32.xlu0 %v803, 113
        %v1406 = vpop.permute.xlu0 %1405
        %1407 = vrot.lane.b32.xlu0 %v805, 113
        %v1408 = vpop.permute.xlu0 %1407
        %1409 = vrot.lane.b32.xlu0 %v807, 113
        %v1410 = vpop.permute.xlu0 %1409
        %vm1411 = vcmp.lt.s32.totalorder %v843, 113
        %v1412 = vsel %vm1411, %v1388, %v1400
        %v1413 = vsel %vm1411, %v1390, %v1402
        %v1414 = vsel %vm1411, %v1392, %v1404
        %v1415 = vsel %vm1411, %v1394, %v1406
        %v1416 = vsel %vm1411, %v1396, %v1408
        %v1417 = vsel %vm1411, %v1398, %v1410
        %v1418 = vsel %vm1411, %v1400, %v1388
        %v1419 = vsel %vm1411, %v1402, %v1390
        %v1420 = vsel %vm1411, %v1404, %v1392
        %v1421 = vsel %vm1411, %v1406, %v1394
        %v1422 = vsel %vm1411, %v1408, %v1396
        %v1423 = vsel %vm1411, %v1410, %v1398
        %1424 = vset.pattern.permute.xlu0 6
        %1425 = vperm.xlu0 %1424, %v808
        %v1426 = vpop.permute.xlu0 %1425
        %1428 = vset.pattern.permute.xlu0 6
        %1429 = vperm.xlu0 %1428, %v809
        %v1430 = vpop.permute.xlu0 %1429
        %1432 = vset.pattern.permute.xlu0 6
        %1433 = vperm.xlu0 %1432, %v810
        %v1434 = vpop.permute.xlu0 %1433
        %1436 = vset.pattern.permute.xlu0 6
        %1437 = vperm.xlu0 %1436, %v811
        %v1438 = vpop.permute.xlu0 %1437
        %1440 = vset.pattern.permute.xlu0 6
        %1441 = vperm.xlu0 %1440, %v812
        %v1442 = vpop.permute.xlu0 %1441
        %1444 = vset.pattern.permute.xlu0 6
        %1445 = vperm.xlu0 %1444, %v813
        %v1446 = vpop.permute.xlu0 %1445
        %v1448 = vmul.f32 %v1412, %v1426
        %v1449 = vmul.f32 %v1418, %v1426
        %v1450 = vmul.f32 %v1413, %v1430
        %v1451 = vmul.f32 %v1419, %v1430
        %v1452 = vmul.f32 %v1414, %v1434
        %v1453 = vmul.f32 %v1420, %v1434
        %v1454 = vmul.f32 %v1415, %v1438
        %v1455 = vmul.f32 %v1421, %v1438
        %v1456 = vmul.f32 %v1416, %v1442
        %v1457 = vmul.f32 %v1422, %v1442
        %v1458 = vmul.f32 %v1417, %v1446
        %v1459 = vmul.f32 %v1423, %v1446
        %v1460 = vlaneseq
        %v1461 = vshrl.u32 %v1460, 7
        %v1462 = vsub.s32 6, %v1461
        %v1463 = vrot.slane %v814, %v1462
        %v1464 = vlaneseq
        %v1465 = vshrl.u32 %v1464, 7
        %v1466 = vsub.s32 6, %v1465
        %v1467 = vrot.slane %v815, %v1466
        %v1468 = vmul.f32 %v1448, %v1463
        %v1469 = vmul.f32 %v1449, %v1467
        %v1470 = vmul.f32 %v1450, %v1463
        %v1471 = vmul.f32 %v1451, %v1467
        %v1472 = vmul.f32 %v1452, %v1463
        %v1473 = vmul.f32 %v1453, %v1467
        %v1474 = vmul.f32 %v1454, %v1463
        %v1475 = vmul.f32 %v1455, %v1467
        %v1476 = vmul.f32 %v1456, %v1463
        %v1477 = vmul.f32 %v1457, %v1467
        %v1478 = vmul.f32 %v1458, %v1463
        %v1479 = vmul.f32 %v1459, %v1467
        %v1480 = vadd.f32 %v1375, %v1468
        %v1481 = vadd.f32 %v1376, %v1469
        %v1482 = vadd.f32 %v1377, %v1470
        %v1483 = vadd.f32 %v1378, %v1471
        %v1484 = vadd.f32 %v1379, %v1472
        %v1485 = vadd.f32 %v1380, %v1473
        %v1486 = vadd.f32 %v1381, %v1474
        %v1487 = vadd.f32 %v1382, %v1475
        %v1488 = vadd.f32 %v1383, %v1476
        %v1489 = vadd.f32 %v1384, %v1477
        %v1490 = vadd.f32 %v1385, %v1478
        %v1491 = vadd.f32 %v1386, %v1479
        %1492 = vrot.lane.b32.xlu0 %v796, 112
        %v1493 = vpop.permute.xlu0 %1492
        %1494 = vrot.lane.b32.xlu0 %v798, 112
        %v1495 = vpop.permute.xlu0 %1494
        %1496 = vrot.lane.b32.xlu0 %v800, 112
        %v1497 = vpop.permute.xlu0 %1496
        %1498 = vrot.lane.b32.xlu0 %v802, 112
        %v1499 = vpop.permute.xlu0 %1498
        %1500 = vrot.lane.b32.xlu0 %v804, 112
        %v1501 = vpop.permute.xlu0 %1500
        %1502 = vrot.lane.b32.xlu0 %v806, 112
        %v1503 = vpop.permute.xlu0 %1502
        %1504 = vrot.lane.b32.xlu0 %v797, 112
        %v1505 = vpop.permute.xlu0 %1504
        %1506 = vrot.lane.b32.xlu0 %v799, 112
        %v1507 = vpop.permute.xlu0 %1506
        %1508 = vrot.lane.b32.xlu0 %v801, 112
        %v1509 = vpop.permute.xlu0 %1508
        %1510 = vrot.lane.b32.xlu0 %v803, 112
        %v1511 = vpop.permute.xlu0 %1510
        %1512 = vrot.lane.b32.xlu0 %v805, 112
        %v1513 = vpop.permute.xlu0 %1512
        %1514 = vrot.lane.b32.xlu0 %v807, 112
        %v1515 = vpop.permute.xlu0 %1514
        %vm1516 = vcmp.lt.s32.totalorder %v843, 112
        %v1517 = vsel %vm1516, %v1493, %v1505
        %v1518 = vsel %vm1516, %v1495, %v1507
        %v1519 = vsel %vm1516, %v1497, %v1509
        %v1520 = vsel %vm1516, %v1499, %v1511
        %v1521 = vsel %vm1516, %v1501, %v1513
        %v1522 = vsel %vm1516, %v1503, %v1515
        %v1523 = vsel %vm1516, %v1505, %v1493
        %v1524 = vsel %vm1516, %v1507, %v1495
        %v1525 = vsel %vm1516, %v1509, %v1497
        %v1526 = vsel %vm1516, %v1511, %v1499
        %v1527 = vsel %vm1516, %v1513, %v1501
        %v1528 = vsel %vm1516, %v1515, %v1503
        %1529 = vset.pattern.permute.xlu0 7
        %1530 = vperm.xlu0 %1529, %v808
        %v1531 = vpop.permute.xlu0 %1530
        %1533 = vset.pattern.permute.xlu0 7
        %1534 = vperm.xlu0 %1533, %v809
        %v1535 = vpop.permute.xlu0 %1534
        %1537 = vset.pattern.permute.xlu0 7
        %1538 = vperm.xlu0 %1537, %v810
        %v1539 = vpop.permute.xlu0 %1538
        %1541 = vset.pattern.permute.xlu0 7
        %1542 = vperm.xlu0 %1541, %v811
        %v1543 = vpop.permute.xlu0 %1542
        %1545 = vset.pattern.permute.xlu0 7
        %1546 = vperm.xlu0 %1545, %v812
        %v1547 = vpop.permute.xlu0 %1546
        %1549 = vset.pattern.permute.xlu0 7
        %1550 = vperm.xlu0 %1549, %v813
        %v1551 = vpop.permute.xlu0 %1550
        %v1553 = vmul.f32 %v1517, %v1531
        %v1554 = vmul.f32 %v1523, %v1531
        %v1555 = vmul.f32 %v1518, %v1535
        %v1556 = vmul.f32 %v1524, %v1535
        %v1557 = vmul.f32 %v1519, %v1539
        %v1558 = vmul.f32 %v1525, %v1539
        %v1559 = vmul.f32 %v1520, %v1543
        %v1560 = vmul.f32 %v1526, %v1543
        %v1561 = vmul.f32 %v1521, %v1547
        %v1562 = vmul.f32 %v1527, %v1547
        %v1563 = vmul.f32 %v1522, %v1551
        %v1564 = vmul.f32 %v1528, %v1551
        %v1565 = vlaneseq
        %v1566 = vshrl.u32 %v1565, 7
        %v1567 = vsub.s32 7, %v1566
        %v1568 = vrot.slane %v814, %v1567
        %v1569 = vlaneseq
        %v1570 = vshrl.u32 %v1569, 7
        %v1571 = vsub.s32 7, %v1570
        %v1572 = vrot.slane %v815, %v1571
        %v1573 = vmul.f32 %v1553, %v1568
        %v1574 = vmul.f32 %v1554, %v1572
        %v1575 = vmul.f32 %v1555, %v1568
        %v1576 = vmul.f32 %v1556, %v1572
        %v1577 = vmul.f32 %v1557, %v1568
        %v1578 = vmul.f32 %v1558, %v1572
        %v1579 = vmul.f32 %v1559, %v1568
        %v1580 = vmul.f32 %v1560, %v1572
        %v1581 = vmul.f32 %v1561, %v1568
        %v1582 = vmul.f32 %v1562, %v1572
        %v1583 = vmul.f32 %v1563, %v1568
        %v1584 = vmul.f32 %v1564, %v1572
        %v1585 = vadd.f32 %v1480, %v1573
        %v1586 = vadd.f32 %v1481, %v1574
        %v1587 = vadd.f32 %v1482, %v1575
        %v1588 = vadd.f32 %v1483, %v1576
        %v1589 = vadd.f32 %v1484, %v1577
        %v1590 = vadd.f32 %v1485, %v1578
        %v1591 = vadd.f32 %v1486, %v1579
        %v1592 = vadd.f32 %v1487, %v1580
        %v1593 = vadd.f32 %v1488, %v1581
        %v1594 = vadd.f32 %v1489, %v1582
        %v1595 = vadd.f32 %v1490, %v1583
        %v1596 = vadd.f32 %v1491, %v1584
        %1597 = vrot.lane.b32.xlu0 %v796, 111
        %v1598 = vpop.permute.xlu0 %1597
        %1599 = vrot.lane.b32.xlu0 %v798, 111
        %v1600 = vpop.permute.xlu0 %1599
        %1601 = vrot.lane.b32.xlu0 %v800, 111
        %v1602 = vpop.permute.xlu0 %1601
        %1603 = vrot.lane.b32.xlu0 %v802, 111
        %v1604 = vpop.permute.xlu0 %1603
        %1605 = vrot.lane.b32.xlu0 %v804, 111
        %v1606 = vpop.permute.xlu0 %1605
        %1607 = vrot.lane.b32.xlu0 %v806, 111
        %v1608 = vpop.permute.xlu0 %1607
        %1609 = vrot.lane.b32.xlu0 %v797, 111
        %v1610 = vpop.permute.xlu0 %1609
        %1611 = vrot.lane.b32.xlu0 %v799, 111
        %v1612 = vpop.permute.xlu0 %1611
        %1613 = vrot.lane.b32.xlu0 %v801, 111
        %v1614 = vpop.permute.xlu0 %1613
        %1615 = vrot.lane.b32.xlu0 %v803, 111
        %v1616 = vpop.permute.xlu0 %1615
        %1617 = vrot.lane.b32.xlu0 %v805, 111
        %v1618 = vpop.permute.xlu0 %1617
        %1619 = vrot.lane.b32.xlu0 %v807, 111
        %v1620 = vpop.permute.xlu0 %1619
        %vm1621 = vcmp.lt.s32.totalorder %v843, 111
        %v1622 = vsel %vm1621, %v1598, %v1610
        %v1623 = vsel %vm1621, %v1600, %v1612
        %v1624 = vsel %vm1621, %v1602, %v1614
        %v1625 = vsel %vm1621, %v1604, %v1616
        %v1626 = vsel %vm1621, %v1606, %v1618
        %v1627 = vsel %vm1621, %v1608, %v1620
        %v1628 = vsel %vm1621, %v1610, %v1598
        %v1629 = vsel %vm1621, %v1612, %v1600
        %v1630 = vsel %vm1621, %v1614, %v1602
        %v1631 = vsel %vm1621, %v1616, %v1604
        %v1632 = vsel %vm1621, %v1618, %v1606
        %v1633 = vsel %vm1621, %v1620, %v1608
        %1634 = vset.pattern.permute.xlu0 8
        %1635 = vperm.xlu0 %1634, %v808
        %v1636 = vpop.permute.xlu0 %1635
        %1638 = vset.pattern.permute.xlu0 8
        %1639 = vperm.xlu0 %1638, %v809
        %v1640 = vpop.permute.xlu0 %1639
        %1642 = vset.pattern.permute.xlu0 8
        %1643 = vperm.xlu0 %1642, %v810
        %v1644 = vpop.permute.xlu0 %1643
        %1646 = vset.pattern.permute.xlu0 8
        %1647 = vperm.xlu0 %1646, %v811
        %v1648 = vpop.permute.xlu0 %1647
        %1650 = vset.pattern.permute.xlu0 8
        %1651 = vperm.xlu0 %1650, %v812
        %v1652 = vpop.permute.xlu0 %1651
        %1654 = vset.pattern.permute.xlu0 8
        %1655 = vperm.xlu0 %1654, %v813
        %v1656 = vpop.permute.xlu0 %1655
        %v1658 = vmul.f32 %v1622, %v1636
        %v1659 = vmul.f32 %v1628, %v1636
        %v1660 = vmul.f32 %v1623, %v1640
        %v1661 = vmul.f32 %v1629, %v1640
        %v1662 = vmul.f32 %v1624, %v1644
        %v1663 = vmul.f32 %v1630, %v1644
        %v1664 = vmul.f32 %v1625, %v1648
        %v1665 = vmul.f32 %v1631, %v1648
        %v1666 = vmul.f32 %v1626, %v1652
        %v1667 = vmul.f32 %v1632, %v1652
        %v1668 = vmul.f32 %v1627, %v1656
        %v1669 = vmul.f32 %v1633, %v1656
        %v1670 = vlaneseq
        %v1671 = vshrl.u32 %v1670, 7
        %v1672 = vsub.s32 0, %v1671
        %v1673 = vrot.slane %v816, %v1672
        %v1674 = vlaneseq
        %v1675 = vshrl.u32 %v1674, 7
        %v1676 = vsub.s32 0, %v1675
        %v1677 = vrot.slane %v817, %v1676
        %v1678 = vmul.f32 %v1658, %v1673
        %v1679 = vmul.f32 %v1659, %v1677
        %v1680 = vmul.f32 %v1660, %v1673
        %v1681 = vmul.f32 %v1661, %v1677
        %v1682 = vmul.f32 %v1662, %v1673
        %v1683 = vmul.f32 %v1663, %v1677
        %v1684 = vmul.f32 %v1664, %v1673
        %v1685 = vmul.f32 %v1665, %v1677
        %v1686 = vmul.f32 %v1666, %v1673
        %v1687 = vmul.f32 %v1667, %v1677
        %v1688 = vmul.f32 %v1668, %v1673
        %v1689 = vmul.f32 %v1669, %v1677
        %v1690 = vadd.f32 %v1585, %v1678
        %v1691 = vadd.f32 %v1586, %v1679
        %v1692 = vadd.f32 %v1587, %v1680
        %v1693 = vadd.f32 %v1588, %v1681
        %v1694 = vadd.f32 %v1589, %v1682
        %v1695 = vadd.f32 %v1590, %v1683
        %v1696 = vadd.f32 %v1591, %v1684
        %v1697 = vadd.f32 %v1592, %v1685
        %v1698 = vadd.f32 %v1593, %v1686
        %v1699 = vadd.f32 %v1594, %v1687
        %v1700 = vadd.f32 %v1595, %v1688
        %v1701 = vadd.f32 %v1596, %v1689
        %v1702 = vld [vmem:[#allocation11] sm:$0xff]
        %v1703 = vld [vmem:[#allocation11 + $0x8] sm:$0xff]
        %v1704 = vld [vmem:[#allocation11 + $0x10] sm:$0xff]
        %v1705 = vld [vmem:[#allocation11 + $0x18] sm:$0xff]
        %v1706 = vld [vmem:[#allocation11 + $0x20] sm:$0xff]
        %v1707 = vld [vmem:[#allocation11 + $0x28] sm:$0xff]
        %1709 = vset.pattern.permute.xlu0 0
        %1710 = vperm.xlu0 %1709, %v1702
        %v1711 = vpop.permute.xlu0 %1710
        %1714 = vset.pattern.permute.xlu0 0
        %1715 = vperm.xlu0 %1714, %v1703
        %v1716 = vpop.permute.xlu0 %1715
        %1719 = vset.pattern.permute.xlu0 0
        %1720 = vperm.xlu0 %1719, %v1704
        %v1721 = vpop.permute.xlu0 %1720
        %1724 = vset.pattern.permute.xlu0 0
        %1725 = vperm.xlu0 %1724, %v1705
        %v1726 = vpop.permute.xlu0 %1725
        %1729 = vset.pattern.permute.xlu0 0
        %1730 = vperm.xlu0 %1729, %v1706
        %v1731 = vpop.permute.xlu0 %1730
        %1734 = vset.pattern.permute.xlu0 0
        %1735 = vperm.xlu0 %1734, %v1707
        %v1736 = vpop.permute.xlu0 %1735
        %v1738 = vadd.f32 %v1690, %v1711
        %v1739 = vadd.f32 %v1691, %v1711
        %v1740 = vadd.f32 %v1692, %v1716
        %v1741 = vadd.f32 %v1693, %v1716
        %v1742 = vadd.f32 %v1694, %v1721
        %v1743 = vadd.f32 %v1695, %v1721
        %v1744 = vadd.f32 %v1696, %v1726
        %v1745 = vadd.f32 %v1697, %v1726
        %v1746 = vadd.f32 %v1698, %v1731
        %v1747 = vadd.f32 %v1699, %v1731
        %v1748 = vadd.f32 %v1700, %v1736
        %v1749 = vadd.f32 %v1701, %v1736
        %v1750 = vxor.u32 %v1738, 2147483648
        %v1751 = vxor.u32 %v1739, 2147483648
        %v1752 = vxor.u32 %v1740, 2147483648
        %v1753 = vxor.u32 %v1741, 2147483648
        %v1754 = vxor.u32 %v1742, 2147483648
        %v1755 = vxor.u32 %v1743, 2147483648
        %v1756 = vxor.u32 %v1744, 2147483648
        %v1757 = vxor.u32 %v1745, 2147483648
        %v1758 = vxor.u32 %v1746, 2147483648
        %v1759 = vxor.u32 %v1747, 2147483648
        %v1760 = vxor.u32 %v1748, 2147483648
        %v1761 = vxor.u32 %v1749, 2147483648
        %v1762 = vmul.f32 %v1750, 1.442695
        %v1763 = vpow.pop %v1762
        %v1764 = vmul.f32 %v1751, 1.442695
        %v1765 = vpow.pop %v1764
        %v1766 = vmul.f32 %v1752, 1.442695
        %v1767 = vpow.pop %v1766
        %v1768 = vmul.f32 %v1753, 1.442695
        %v1769 = vpow.pop %v1768
        %v1770 = vmul.f32 %v1754, 1.442695
        %v1771 = vpow.pop %v1770
        %v1772 = vmul.f32 %v1755, 1.442695
        %v1773 = vpow.pop %v1772
        %v1774 = vmul.f32 %v1756, 1.442695
        %v1775 = vpow.pop %v1774
        %v1776 = vmul.f32 %v1757, 1.442695
        %v1777 = vpow.pop %v1776
        %v1778 = vmul.f32 %v1758, 1.442695
        %v1779 = vpow.pop %v1778
        %v1780 = vmul.f32 %v1759, 1.442695
        %v1781 = vpow.pop %v1780
        %v1782 = vmul.f32 %v1760, 1.442695
        %v1783 = vpow.pop %v1782
        %v1784 = vmul.f32 %v1761, 1.442695
        %v1785 = vpow.pop %v1784
        %v1786 = vadd.f32 %v1763, 1.0
        %v1787 = vadd.f32 %v1765, 1.0
        %v1788 = vadd.f32 %v1767, 1.0
        %v1789 = vadd.f32 %v1769, 1.0
        %v1790 = vadd.f32 %v1771, 1.0
        %v1791 = vadd.f32 %v1773, 1.0
        %v1792 = vadd.f32 %v1775, 1.0
        %v1793 = vadd.f32 %v1777, 1.0
        %v1794 = vadd.f32 %v1779, 1.0
        %v1795 = vadd.f32 %v1781, 1.0
        %v1796 = vadd.f32 %v1783, 1.0
        %v1797 = vadd.f32 %v1785, 1.0
        %v1798 = vrcp.pop %v1786
        %v1799 = vmul.f32 1.0, %v1798
        %v1800 = vrcp.pop %v1787
        %v1801 = vmul.f32 1.0, %v1800
        %v1802 = vrcp.pop %v1788
        %v1803 = vmul.f32 1.0, %v1802
        %v1804 = vrcp.pop %v1789
        %v1805 = vmul.f32 1.0, %v1804
        %v1806 = vrcp.pop %v1790
        %v1807 = vmul.f32 1.0, %v1806
        %v1808 = vrcp.pop %v1791
        %v1809 = vmul.f32 1.0, %v1808
        %v1810 = vrcp.pop %v1792
        %v1811 = vmul.f32 1.0, %v1810
        %v1812 = vrcp.pop %v1793
        %v1813 = vmul.f32 1.0, %v1812
        %v1814 = vrcp.pop %v1794
        %v1815 = vmul.f32 1.0, %v1814
        %v1816 = vrcp.pop %v1795
        %v1817 = vmul.f32 1.0, %v1816
        %v1818 = vrcp.pop %v1796
        %v1819 = vmul.f32 1.0, %v1818
        %v1820 = vrcp.pop %v1797
        %v1821 = vmul.f32 1.0, %v1820
        %v1822 = vmul.f32 %v1738, %v1799
        %v1823 = vmul.f32 %v1739, %v1801
        %v1824 = vmul.f32 %v1740, %v1803
        %v1825 = vmul.f32 %v1741, %v1805
        %v1826 = vmul.f32 %v1742, %v1807
        %v1827 = vmul.f32 %v1743, %v1809
        %v1828 = vmul.f32 %v1744, %v1811
        %v1829 = vmul.f32 %v1745, %v1813
        %v1830 = vmul.f32 %v1746, %v1815
        %v1831 = vmul.f32 %v1747, %v1817
        %v1832 = vmul.f32 %v1748, %v1819
        %v1833 = vmul.f32 %v1749, %v1821
        %v1834 = vadd.f32 %v1822, %v1823
        %1835 = vadd.xlane.f32.xlu0 %v1834
        %v1836 = vpop.xlane.xlu0 %1835
        %v1837 = vadd.f32 %v1824, %v1825
        %1838 = vadd.xlane.f32.xlu0 %v1837
        %v1839 = vpop.xlane.xlu0 %1838
        %v1840 = vadd.f32 %v1826, %v1827
        %1841 = vadd.xlane.f32.xlu0 %v1840
        %v1842 = vpop.xlane.xlu0 %1841
        %v1843 = vadd.f32 %v1828, %v1829
        %1844 = vadd.xlane.f32.xlu0 %v1843
        %v1845 = vpop.xlane.xlu0 %1844
        %v1846 = vadd.f32 %v1830, %v1831
        %1847 = vadd.xlane.f32.xlu0 %v1846
        %v1848 = vpop.xlane.xlu0 %1847
        %v1849 = vadd.f32 %v1832, %v1833
        %1850 = vadd.xlane.f32.xlu0 %v1849
        %v1851 = vpop.xlane.xlu0 %1850
        %v1852 = vrcp.pop 256.0
        %v1853 = vmul.f32 %v1836, %v1852
        %v1854 = vmul.f32 %v1839, %v1852
        %v1855 = vmul.f32 %v1842, %v1852
        %v1856 = vmul.f32 %v1845, %v1852
        %v1857 = vmul.f32 %v1848, %v1852
        %v1858 = vmul.f32 %v1851, %v1852
        %v1859 = vld [vmem:[#allocation13] sm:$0x3]
        %v1860 = vld [vmem:[#allocation14] sm:$0x3]
        %vm1861 = vcmask 392192
        %v1863 = vsel %vm1861, %v1859, 0
        %1865 = vmatprep.subr.mxu0 0.0
        %1866 = vmatpush1.msra.mxu0 %v1853
        %1867 = vmatprep.subr.mxu0 0.0
        %1868 = vmatpush1.msra.mxu0 %v1854
        %1869 = vmatprep.subr.mxu0 0.0
        %1870 = vmatpush1.msra.mxu0 %v1855
        %1871 = vmatprep.subr.mxu0 0.0
        %1872 = vmatpush1.msra.mxu0 %v1856
        %1873 = vmatprep.subr.mxu0 0.0
        %1874 = vmatpush1.msra.mxu0 %v1857
        %1875 = vmatprep.subr.mxu0 0.0
        %1876 = vmatpush1.msra.mxu0 %v1858
        %1877 = vmatprep.subr.mxu0 0.0
        %1878 = vmatpush1.msra.mxu0 0.0
        %1879 = vmatprep.subr.mxu0 0.0
        %1880 = vmatpush1.msra.mxu0 0.0
        %1881 = vmatprep.subr.mxu0 0.0
        %1882 = vmatpush1.msra.mxu0 0.0
        %1883 = vmatprep.subr.mxu0 0.0
        %1884 = vmatpush1.msra.mxu0 0.0
        %1885 = vmatprep.subr.mxu0 0.0
        %1886 = vmatpush1.msra.mxu0 0.0
        %1887 = vmatprep.subr.mxu0 0.0
        %1888 = vmatpush1.msra.mxu0 0.0
        %1889 = vmatprep.subr.mxu0 0.0
        %1890 = vmatpush1.msra.mxu0 0.0
        %1891 = vmatprep.subr.mxu0 0.0
        %1892 = vmatpush1.msra.mxu0 0.0
        %1893 = vmatprep.subr.mxu0 0.0
        %1894 = vmatpush1.msra.mxu0 0.0
        %1895 = vmatprep.subr.mxu0 0.0
        %1896 = vmatpush1.msra.mxu0 0.0
        %1897 = vmatprep.subr.mxu0 0.0
        %1898 = vmatpush1.msra.mxu0 0.0
        %1899 = vmatprep.subr.mxu0 0.0
        %1900 = vmatpush1.msra.mxu0 0.0
        %1901 = vmatprep.subr.mxu0 0.0
        %1902 = vmatpush1.msra.mxu0 0.0
        %1903 = vmatprep.subr.mxu0 0.0
        %1904 = vmatpush1.msra.mxu0 0.0
        %1905 = vmatprep.subr.mxu0 0.0
        %1906 = vmatpush1.msra.mxu0 0.0
        %1907 = vmatprep.subr.mxu0 0.0
        %1908 = vmatpush1.msra.mxu0 0.0
        %1909 = vmatprep.subr.mxu0 0.0
        %1910 = vmatpush1.msra.mxu0 0.0
        %1911 = vmatprep.subr.mxu0 0.0
        %1912 = vmatpush1.msra.mxu0 0.0
        %1913 = vmatprep.subr.mxu0 0.0
        %1914 = vmatpush1.msra.mxu0 0.0
        %1915 = vmatprep.subr.mxu0 0.0
        %1916 = vmatpush1.msra.mxu0 0.0
        %1917 = vmatprep.subr.mxu0 0.0
        %1918 = vmatpush1.msra.mxu0 0.0
        %1919 = vmatprep.subr.mxu0 0.0
        %1920 = vmatpush1.msra.mxu0 0.0
        %1921 = vmatprep.subr.mxu0 0.0
        %1922 = vmatpush1.msra.mxu0 0.0
        %1923 = vmatprep.subr.mxu0 0.0
        %1924 = vmatpush1.msra.mxu0 0.0
        %1925 = vmatprep.subr.mxu0 0.0
        %1926 = vmatpush1.msra.mxu0 0.0
        %1927 = vmatprep.subr.mxu0 0.0
        %1928 = vmatpush1.msra.mxu0 0.0
        %1929 = vmatprep.mubr.f32.mxu0 0.0
        %1930 = vmatmul.mubr.f32.gmra.mrb[0].mxu0 %v1863
        %v1931 = vpop.f32.mrb[0].mxu0
        %v1932 = vadd.f32 %v1860, %v1931
        %v1933 = vpop.f32.mrb[0].mxu0
        %1934 = vdwg.mxu0
        %v1935 = vmax.f32 %v1932, 0.0
        %v1936 = vld [vmem:[#allocation16] sm:$0xff]
        %v1937 = vld [vmem:[#allocation16 + $0x8] sm:$0xff]
        %v1938 = vld [vmem:[#allocation16 + $0x10] sm:$0xff]
        %v1939 = vld [vmem:[#allocation16 + $0x18] sm:$0xff]
        %v1940 = vld [vmem:[#allocation16 + $0x20] sm:$0xff]
        %v1941 = vld [vmem:[#allocation16 + $0x28] sm:$0xff]
        %v1942 = vld [vmem:[#allocation17] sm:$0xff]
        %v1943 = vld [vmem:[#allocation17 + $0x8] sm:$0xff]
        %v1944 = vld [vmem:[#allocation17 + $0x10] sm:$0xff]
        %v1945 = vld [vmem:[#allocation17 + $0x18] sm:$0xff]
        %v1946 = vld [vmem:[#allocation17 + $0x20] sm:$0xff]
        %v1947 = vld [vmem:[#allocation17 + $0x28] sm:$0xff]
        %vm1948 = vcmask 15360
        %v1950 = vsel %vm1948, %v1936, 0
        %v1953 = vsel %vm1948, %v1937, 0
        %v1956 = vsel %vm1948, %v1938, 0
        %v1959 = vsel %vm1948, %v1939, 0
        %v1962 = vsel %vm1948, %v1940, 0
        %v1965 = vsel %vm1948, %v1941, 0
        %vm1967 = vcmask 1041408
        %v1969 = vsel %vm1967, %v1935, 0
        %1971 = vmatprep.subr.mxu0 0.0
        %1972 = vmatpush1.msra.mxu0 %v1969
        %1973 = vmatprep.subr.mxu0 0.0
        %1974 = vmatpush1.msra.mxu0 0.0
        %1975 = vmatprep.subr.mxu0 0.0
        %1976 = vmatpush1.msra.mxu0 0.0
        %1977 = vmatprep.subr.mxu0 0.0
        %1978 = vmatpush1.msra.mxu0 0.0
        %1979 = vmatprep.subr.mxu0 0.0
        %1980 = vmatpush1.msra.mxu0 0.0
        %1981 = vmatprep.subr.mxu0 0.0
        %1982 = vmatpush1.msra.mxu0 0.0
        %1983 = vmatprep.subr.mxu0 0.0
        %1984 = vmatpush1.msra.mxu0 0.0
        %1985 = vmatprep.subr.mxu0 0.0
        %1986 = vmatpush1.msra.mxu0 0.0
        %1987 = vmatprep.subr.mxu0 0.0
        %1988 = vmatpush1.msra.mxu0 0.0
        %1989 = vmatprep.subr.mxu0 0.0
        %1990 = vmatpush1.msra.mxu0 0.0
        %1991 = vmatprep.subr.mxu0 0.0
        %1992 = vmatpush1.msra.mxu0 0.0
        %1993 = vmatprep.subr.mxu0 0.0
        %1994 = vmatpush1.msra.mxu0 0.0
        %1995 = vmatprep.subr.mxu0 0.0
        %1996 = vmatpush1.msra.mxu0 0.0
        %1997 = vmatprep.subr.mxu0 0.0
        %1998 = vmatpush1.msra.mxu0 0.0
        %1999 = vmatprep.subr.mxu0 0.0
        %2000 = vmatpush1.msra.mxu0 0.0
        %2001 = vmatprep.subr.mxu0 0.0
        %2002 = vmatpush1.msra.mxu0 0.0
        %2003 = vmatprep.subr.mxu0 0.0
        %2004 = vmatpush1.msra.mxu0 0.0
        %2005 = vmatprep.subr.mxu0 0.0
        %2006 = vmatpush1.msra.mxu0 0.0
        %2007 = vmatprep.subr.mxu0 0.0
        %2008 = vmatpush1.msra.mxu0 0.0
        %2009 = vmatprep.subr.mxu0 0.0
        %2010 = vmatpush1.msra.mxu0 0.0
        %2011 = vmatprep.subr.mxu0 0.0
        %2012 = vmatpush1.msra.mxu0 0.0
        %2013 = vmatprep.subr.mxu0 0.0
        %2014 = vmatpush1.msra.mxu0 0.0
        %2015 = vmatprep.subr.mxu0 0.0
        %2016 = vmatpush1.msra.mxu0 0.0
        %2017 = vmatprep.subr.mxu0 0.0
        %2018 = vmatpush1.msra.mxu0 0.0
        %2019 = vmatprep.subr.mxu0 0.0
        %2020 = vmatpush1.msra.mxu0 0.0
        %2021 = vmatprep.subr.mxu0 0.0
        %2022 = vmatpush1.msra.mxu0 0.0
        %2023 = vmatprep.subr.mxu0 0.0
        %2024 = vmatpush1.msra.mxu0 0.0
        %2025 = vmatprep.subr.mxu0 0.0
        %2026 = vmatpush1.msra.mxu0 0.0
        %2027 = vmatprep.subr.mxu0 0.0
        %2028 = vmatpush1.msra.mxu0 0.0
        %2029 = vmatprep.subr.mxu0 0.0
        %2030 = vmatpush1.msra.mxu0 0.0
        %2031 = vmatprep.subr.mxu0 0.0
        %2032 = vmatpush1.msra.mxu0 0.0
        %2033 = vmatprep.subr.mxu0 0.0
        %2034 = vmatpush1.msra.mxu0 0.0
        %2035 = vmatprep.mubr.f32.mxu0 0.0
        %2036 = vmatmul.mubr.f32.gmra.mrb[0].mxu0 %v1950
        %v2037 = vpop.f32.mrb[0].mxu0
        %v2038 = vadd.f32 %v1942, %v2037
        %v2039 = vpop.f32.mrb[0].mxu0
        %2040 = vmatprep.mubr.f32.mxu0 0.0
        %2041 = vmatmul.mubr.f32.gmra.mrb[0].mxu0 %v1953
        %v2042 = vpop.f32.mrb[0].mxu0
        %v2043 = vadd.f32 %v1943, %v2042
        %v2044 = vpop.f32.mrb[0].mxu0
        %2045 = vmatprep.mubr.f32.mxu0 0.0
        %2046 = vmatmul.mubr.f32.gmra.mrb[0].mxu0 %v1956
        %v2047 = vpop.f32.mrb[0].mxu0
        %v2048 = vadd.f32 %v1944, %v2047
        %v2049 = vpop.f32.mrb[0].mxu0
        %2050 = vmatprep.mubr.f32.mxu0 0.0
        %2051 = vmatmul.mubr.f32.gmra.mrb[0].mxu0 %v1959
        %v2052 = vpop.f32.mrb[0].mxu0
        %v2053 = vadd.f32 %v1945, %v2052
        %v2054 = vpop.f32.mrb[0].mxu0
        %2055 = vmatprep.mubr.f32.mxu0 0.0
        %2056 = vmatmul.mubr.f32.gmra.mrb[0].mxu0 %v1962
        %v2057 = vpop.f32.mrb[0].mxu0
        %v2058 = vadd.f32 %v1946, %v2057
        %v2059 = vpop.f32.mrb[0].mxu0
        %2060 = vmatprep.mubr.f32.mxu0 0.0
        %2061 = vmatmul.mubr.f32.gmra.mrb[0].mxu0 %v1965
        %v2062 = vpop.f32.mrb[0].mxu0
        %v2063 = vadd.f32 %v1947, %v2062
        %v2064 = vpop.f32.mrb[0].mxu0
        %2065 = vdwg.mxu0
        %v2066 = vxor.u32 %v2038, 2147483648
        %v2067 = vxor.u32 %v2043, 2147483648
        %v2068 = vxor.u32 %v2048, 2147483648
        %v2069 = vxor.u32 %v2053, 2147483648
        %v2070 = vxor.u32 %v2058, 2147483648
        %v2071 = vxor.u32 %v2063, 2147483648
        %v2072 = vmul.f32 %v2066, 1.442695
        %v2073 = vpow.pop %v2072
        %v2074 = vmul.f32 %v2067, 1.442695
        %v2075 = vpow.pop %v2074
        %v2076 = vmul.f32 %v2068, 1.442695
        %v2077 = vpow.pop %v2076
        %v2078 = vmul.f32 %v2069, 1.442695
        %v2079 = vpow.pop %v2078
        %v2080 = vmul.f32 %v2070, 1.442695
        %v2081 = vpow.pop %v2080
        %v2082 = vmul.f32 %v2071, 1.442695
        %v2083 = vpow.pop %v2082
        %v2084 = vadd.f32 %v2073, 1.0
        %v2085 = vadd.f32 %v2075, 1.0
        %v2086 = vadd.f32 %v2077, 1.0
        %v2087 = vadd.f32 %v2079, 1.0
        %v2088 = vadd.f32 %v2081, 1.0
        %v2089 = vadd.f32 %v2083, 1.0
        %v2090 = vrcp.pop %v2084
        %v2091 = vmul.f32 1.0, %v2090
        %v2092 = vrcp.pop %v2085
        %v2093 = vmul.f32 1.0, %v2092
        %v2094 = vrcp.pop %v2086
        %v2095 = vmul.f32 1.0, %v2094
        %v2096 = vrcp.pop %v2087
        %v2097 = vmul.f32 1.0, %v2096
        %v2098 = vrcp.pop %v2088
        %v2099 = vmul.f32 1.0, %v2098
        %v2100 = vrcp.pop %v2089
        %v2101 = vmul.f32 1.0, %v2100
        %2103 = vset.pattern.permute.xlu0 0
        %2104 = vperm.xlu0 %2103, %v2091
        %v2105 = vpop.permute.xlu0 %2104
        %2108 = vset.pattern.permute.xlu0 0
        %2109 = vperm.xlu0 %2108, %v2093
        %v2110 = vpop.permute.xlu0 %2109
        %2113 = vset.pattern.permute.xlu0 0
        %2114 = vperm.xlu0 %2113, %v2095
        %v2115 = vpop.permute.xlu0 %2114
        %2118 = vset.pattern.permute.xlu0 0
        %2119 = vperm.xlu0 %2118, %v2097
        %v2120 = vpop.permute.xlu0 %2119
        %2123 = vset.pattern.permute.xlu0 0
        %2124 = vperm.xlu0 %2123, %v2099
        %v2125 = vpop.permute.xlu0 %2124
        %2128 = vset.pattern.permute.xlu0 0
        %2129 = vperm.xlu0 %2128, %v2101
        %v2130 = vpop.permute.xlu0 %2129
        %v2132 = vmul.f32 %v1822, %v2105
        %v2133 = vmul.f32 %v1823, %v2105
        %v2134 = vmul.f32 %v1824, %v2110
        %v2135 = vmul.f32 %v1825, %v2110
        %v2136 = vmul.f32 %v1826, %v2115
        %v2137 = vmul.f32 %v1827, %v2115
        %v2138 = vmul.f32 %v1828, %v2120
        %v2139 = vmul.f32 %v1829, %v2120
        %v2140 = vmul.f32 %v1830, %v2125
        %v2141 = vmul.f32 %v1831, %v2125
        %v2142 = vmul.f32 %v1832, %v2130
        %v2143 = vmul.f32 %v1833, %v2130
        %v2144 = vld [vmem:[#allocation19] sm:$0xf]
        %v2145 = vpack.c.bf16 %v2134, %v2132
        %v2146 = vpack.c.bf16 %v2135, %v2133
        %v2147 = vpack.c.bf16 %v2138, %v2136
        %v2148 = vpack.c.bf16 %v2139, %v2137
        %v2149 = vpack.c.bf16 %v2142, %v2140
        %v2150 = vpack.c.bf16 %v2143, %v2141
        %v2151 = vld [vmem:[#allocation20] sm:$0xff]
        %2153 = vset.pattern.permute.xlu0 0
        %2154 = vperm.xlu0 %2153, %v2151
        %v2155 = vpop.permute.xlu0 %2154
        %v2158 = vsel %vm1861, %v2144, 0
        %2160 = vmatprep.subr.bf16.mxu0 %v2146
        %2161 = vmatpush1.bf16.msra.mxu0 %v2145
        %2162 = vmatprep.subr.bf16.mxu0 %v2148
        %2163 = vmatpush1.bf16.msra.mxu0 %v2147
        %2164 = vmatprep.subr.bf16.mxu0 %v2150
        %2165 = vmatpush1.bf16.msra.mxu0 %v2149
        %2166 = vmatprep.subr.bf16.mxu0 0
        %2167 = vmatpush1.bf16.msra.mxu0 0
        %2168 = vmatprep.subr.bf16.mxu0 0
        %2169 = vmatpush1.bf16.msra.mxu0 0
        %2170 = vmatprep.subr.bf16.mxu0 0
        %2171 = vmatpush1.bf16.msra.mxu0 0
        %2172 = vmatprep.subr.bf16.mxu0 0
        %2173 = vmatpush1.bf16.msra.mxu0 0
        %2174 = vmatprep.subr.bf16.mxu0 0
        %2175 = vmatpush1.bf16.msra.mxu0 0
        %2176 = vmatprep.subr.bf16.mxu0 0
        %2177 = vmatpush1.bf16.msra.mxu0 0
        %2178 = vmatprep.subr.bf16.mxu0 0
        %2179 = vmatpush1.bf16.msra.mxu0 0
        %2180 = vmatprep.subr.bf16.mxu0 0
        %2181 = vmatpush1.bf16.msra.mxu0 0
        %2182 = vmatprep.subr.bf16.mxu0 0
        %2183 = vmatpush1.bf16.msra.mxu0 0
        %2184 = vmatprep.subr.bf16.mxu0 0
        %2185 = vmatpush1.bf16.msra.mxu0 0
        %2186 = vmatprep.subr.bf16.mxu0 0
        %2187 = vmatpush1.bf16.msra.mxu0 0
        %2188 = vmatprep.subr.bf16.mxu0 0
        %2189 = vmatpush1.bf16.msra.mxu0 0
        %2190 = vmatprep.subr.bf16.mxu0 0
        %2191 = vmatpush1.bf16.msra.mxu0 0
        %2192 = vmatprep.mubr.bf16.mxu0 0
        %2193 = vmatmul.mubr.bf16.gmra.mrb[0].mxu0 %v2158
        %v2194 = vpop.f32.mrb[0].mxu0
        %v2195 = vadd.f32 %v2155, %v2194
        %v2196 = vpop.f32.mrb[0].mxu0
        %v2197 = vadd.f32 %v2155, %v2196
        %v2198 = vpop.f32.mrb[0].mxu0
        %v2199 = vpop.f32.mrb[0].mxu0
        %2200 = vdwg.mxu0
        %v2201 = vxor.u32 %v2195, 2147483648
        %v2202 = vxor.u32 %v2197, 2147483648
        %v2203 = vmul.f32 %v2201, 1.442695
        %v2204 = vpow.pop %v2203
        %v2205 = vmul.f32 %v2202, 1.442695
        %v2206 = vpow.pop %v2205
        %v2207 = vadd.f32 %v2204, 1.0
        %v2208 = vadd.f32 %v2206, 1.0
        %v2209 = vrcp.pop %v2207
        %v2210 = vmul.f32 1.0, %v2209
        %v2211 = vrcp.pop %v2208
        %v2212 = vmul.f32 1.0, %v2211
        %v2213 = vmul.f32 %v2195, %v2210
        %v2214 = vmul.f32 %v2197, %v2212
        %v2215 = vadd.f32 %v2213, %v583
        %v2216 = vadd.f32 %v2214, %v584
        %2217 = vst [vmem:[%s581] sm:$0xff] %v2215
        %2218 = vst [vmem:[%s581 + $0x8] sm:$0xff] %v2216
        %s2219 = sand.u32 %s300, 1
        %s2220 = scalar_lea.sflag [#allocation4], %s2219
        %s2221 = sand.u32 %s300, 1
        %s2222 = smul.addr %s2221, 16
        %s2223 = scalar_lea.vmem [#allocation22], %s2222
        // Predicated region
        $region117: #{tpu_custom_call.1} parent=67 // pred_check
          %p2224 = pneg %p310
        $region118: #{tpu_custom_call.1} parent=67 // pred_check_branch
          %2226 = sbr.rel (%p2224) target = $region120
        $region119: #{tpu_custom_call.1} parent=67 // pred_region
          %s2228 = ssub.s32 256, 256
          %2229 = vsyncadd %s2220, %s2228
          %s2230 = smul.addr %s35, 2
          %s2231 = smul.addr %s2230, 128
          %s2232 = scalar_lea.hbm %s12, %s2231
          %s2234 = sshll.u32 %s2223, 4
          %s2235 = int_to_ptr.vmem [resolvable:$true] %s2234
          %2237 = dma.vmem_to_hbm [thread:$0]  %s2235, 256, %s2232, %s2220
        $region120: #{tpu_custom_call.1} parent=67 // pred_fallthru
          _
      $region68: #{tpu_custom_call.1} parent=5 // pred_fallthru
        _
      %p2238 = scmp.le.s32.totalorder 2, %s30
      // Predicated region
      $region121: #{tpu_custom_call.1} parent=5 // pred_check
        %p2239 = pneg %p2238
      $region122: #{tpu_custom_call.1} parent=5 // pred_check_branch
        %2241 = sbr.rel (%p2239) target = $region124
      $region123: #{tpu_custom_call.1} parent=5 // pred_region
        %s2242 = ssub.s32 %s30, 2
        // Predicated region
        $region125: #{tpu_custom_call.1} parent=123 // pred_check
          %p2243 = pneg %p316
        $region126: #{tpu_custom_call.1} parent=123 // pred_check_branch
          %2245 = sbr.rel (%p2243) target = $region128
        $region127: #{tpu_custom_call.1} parent=123 // pred_region
          %s2246 = sand.u32 %s301, 1
          %s2247 = scalar_lea.sflag [#allocation4], %s2246
          %s2248 = sand.u32 %s301, 1
          %s2249 = smul.addr %s2248, 16
          %s2250 = scalar_lea.vmem [#allocation22], %s2249
          %2251 = dma.done %s2247, 256
        $region128: #{tpu_custom_call.1} parent=123 // pred_fallthru
          _
      $region124: #{tpu_custom_call.1} parent=5 // pred_fallthru
        _
    $region6: #{tpu_custom_call.1} parent=1 // loop_footer
      %s34 = sadd.s32 1, %s30
    $region7: #{tpu_custom_call.1} parent=1 // loop_footer_branch
      %29 = sbr.rel target = $region3
    $region8: #{tpu_custom_call.1} parent=1 // loop_exit
      _
    %2252 = vsyncpa [#allocation3], 1
    %s2253 = scalar_lea.sflag [#allocation3], 1
    %2254 = vsyncpa %s2253, 1
    %2255 = vsyncpa [#allocation6], 1
    %2256 = vsyncpa [#allocation9], 1
    %2257 = vsyncpa [#allocation12], 1
    %2258 = vsyncpa [#allocation15], 1
    %2259 = vsyncpa [#allocation18], 1
    %2260 = vsyncpa [#allocation21], 1
    %2261 = vsyncpa [#allocation4], 1
    %s2262 = scalar_lea.sflag [#allocation4], 1
    %2263 = vsyncpa %s2262, 1

</llo_original>
